<compile_context>
chip_gen: v6e
topology: v6e:2x2x1
jax: 0.10.0
libtpu: 0.0.40
codegen_flags: <defaults>
</compile_context>

<pallas_src>
import functools

import numpy as np
import jax
import jax.numpy as jnp
from jax import lax
from jax.experimental import pallas as pl
from jax.experimental.pallas import tpu as pltpu


def _shift_rows(x, direction, edge_vals, use_roll):
    """result[:, h, :] = x[:, h - direction, :]; the exposed edge row is
    replaced by edge_vals (C, 1, W): the halo row, or zeros at image edges."""
    C, TH, W = x.shape
    if use_roll:
        rolled = pltpu.roll(x, shift=direction, axis=1)          # XLU sublane rotate
        row_idx = lax.broadcasted_iota(jnp.int32, (TH, W), 0)
        edge = 0 if direction == 1 else TH - 1
        return jnp.where(row_idx == edge, edge_vals, rolled)
    # Concatenate fallback (narrow / unaligned tiles): one small concat.
    if direction == 1:
        return jnp.concatenate([edge_vals, x[:, :TH - 1, :]], axis=1)
    return jnp.concatenate([x[:, 1:, :], edge_vals], axis=1)


def _shift_cols(x, direction, use_roll):
    """result[:, :, w] = x[:, :, w - direction]; exposed edge column = 0."""
    C, TH, W = x.shape
    if use_roll:
        rolled = pltpu.roll(x, shift=direction, axis=2)          # XLU lane rotate
        col_idx = lax.broadcasted_iota(jnp.int32, (TH, W), 1)
        edge = 0 if direction == 1 else W - 1
        return jnp.where(col_idx == edge, 0.0, rolled)
    zero_col = jnp.zeros((C, TH, 1), x.dtype)
    if direction == 1:
        return jnp.concatenate([zero_col, x[:, :, :W - 1]], axis=2)
    return jnp.concatenate([x[:, :, 1:], zero_col], axis=2)


def _red_kernel(w_ref, b_ref, x_ref, top_ref, bot_ref, out_ref, acc_ref,
                *, num_row_tiles, halo_rows, use_roll):
    # w_ref   : (C*C*9,) f32, SMEM   -- conv weights, flattened OIHW order
    # b_ref   : (C,)     f32, SMEM   -- conv bias
    # x_ref   : (C, TH, W) f32, VMEM -- current row tile of x (batch squeezed)
    # top_ref : (C, halo_rows, W)    -- block containing the row above the tile
    # bot_ref : (C, halo_rows, W)    -- block containing the row below the tile
    # out_ref : (1, 1, 1) f32        -- per-batch partial sum of x*(x - rec(x))
    # acc_ref : (TH, W) f32, VMEM scratch -- element-wise running accumulator
    C, TH, W = x_ref.shape
    t = pl.program_id(1)

    x = x_ref[...]                                       # (C, TH, W); center tap too

    # Row halos (single row above / below the tile), zeroed at the image
    # top / bottom ('SAME' zero padding).
    top = jnp.where(t > 0, top_ref[:, halo_rows - 1:halo_rows, :], 0.0)   # (C,1,W)
    bot = jnp.where(t < num_row_tiles - 1, bot_ref[:, 0:1, :], 0.0)       # (C,1,W)

    x_up = _shift_rows(x, +1, top, use_roll)             # x[.., h-1, ..]
    x_dn = _shift_rows(x, -1, bot, use_roll)             # x[.., h+1, ..]

    # The 9 shifted source stacks, indexed tap = ky*3 + kx (OIHW tap order),
    # hoisted once (not rebuilt per output channel).
    srcs = []
    for xv in (x_up, x, x_dn):                           # ky = 0, 1, 2
        srcs.append(_shift_cols(xv, +1, use_roll))       # kx = 0: x[.., w-1]
        srcs.append(xv)                                  # kx = 1
        srcs.append(_shift_cols(xv, -1, use_roll))       # kx = 2: x[.., w+1]

    # co outermost: one live (TH, W) diff accumulator, contribution folded
    # into `contrib` immediately (no C-deep rec accumulator list / RMW).
    # NOTE: scalar-times-vector VPU FMAs are the right choice for small C;
    # for C >= ~32 switch to an MXU contraction; bf16 tap math would help on
    # v6e/v7x but is kept f32 here for exactness of the loss scalar.
    contrib = jnp.zeros((TH, W), jnp.float32)
    for co in range(C):
        xc = x[co]
        diff = xc - b_ref[co]                            # x - bias
        for tap in range(9):
            src = srcs[tap]
            for ci in range(C):
                diff = diff - w_ref[(co * C + ci) * 9 + tap] * src[ci]
        contrib = contrib + xc * diff                    # x_co*(x_co - rec_co - b_co)

    if num_row_tiles == 1:
        out_ref[...] = jnp.sum(contrib).reshape(1, 1, 1)
    else:
        @pl.when(t == 0)
        def _():
            acc_ref[...] = contrib                       # direct store, no zero-init

        @pl.when(t > 0)
        def _():
            acc_ref[...] += contrib

        @pl.when(t == num_row_tiles - 1)
        def _():
            out_ref[...] = jnp.sum(acc_ref[...]).reshape(1, 1, 1)


def _vmem_budgets():
    """(live-state budget for tile sizing, vmem_limit_bytes) per generation:
    v5e/v6e have 128 MiB physical VMEM -> large tiles; v7x has 64 MiB -> keep
    the double-buffered footprint conservative."""
    cap = 64 * 1024 * 1024                     # conservative default (v7x-like)
    try:
        cap = int(pltpu.get_tpu_info().vmem_capacity_bytes)
    except Exception:
        pass
    if cap >= 128 * 1024 * 1024:               # v5e / v6e
        return 48 * 1024 * 1024, 100 * 1024 * 1024
    return 12 * 1024 * 1024, 32 * 1024 * 1024  # v7x / unknown


def _choose_tile_rows(C, H, W, budget_bytes):
    """Largest row tile (multiple of 8 dividing H) fitting the VMEM budget.
    Live footprint per tile row ~ 2x double-buffered x block + x_up/x_dn +
    nine shifted sources + contrib/acc ~= (13*C + 4) * W * 4 bytes."""
    bytes_per_row = (13 * C + 4) * W * 4
    max_rows = max(8, budget_bytes // bytes_per_row)
    if H <= max_rows or H % 8 != 0:
        # TODO: ragged last tile (pl.cdiv + row masking) would allow tiling
        # heights that are not multiples of 8; whole-image tile for now.
        return H
    r = min(max_rows, H) // 8 * 8
    while r >= 8:
        if H % r == 0:
            return r
        r -= 8
    return H


def red_regularizer(x_nchw, weight_oihw, bias, lambda_reg=1.0, tile_rows=None):
    """RED regularizer 0.5*lambda*sum(x*(x - conv3x3(x) - b)) via Pallas.

    x_nchw: (B, C, H, W).  weight_oihw: (C, C, 3, 3).  bias: (C,).
    Returns a scalar float32.
    """
    B, C, H, W = x_nchw.shape
    assert weight_oihw.shape == (C, C, 3, 3)
    assert bias.shape == (C,)
    assert H >= 2 and W >= 2

    x = x_nchw.astype(jnp.float32)
    w_flat = weight_oihw.astype(jnp.float32).reshape(-1)      # OIHW row-major
    b_vec = bias.astype(jnp.float32)

    budget, vmem_limit = _vmem_budgets()
    TH = _choose_tile_rows(C, H, W, budget) if tile_rows is None else int(tile_rows)
    if H % TH != 0:
        raise ValueError(f"tile_rows={TH} must divide H={H}")
    NT = H // TH
    if NT > 1 and (TH % 8 != 0 or H % 8 != 0):
        raise ValueError("tiling H requires H and tile_rows to be multiples of 8")

    # Roll path needs vreg-aligned minor dims; narrow images use the concat
    # fallback.  TODO: lane-pack k rows per vreg row when W < 128 so the roll
    # path (and full 128-lane utilization) also applies to narrow images.
    use_roll = (W % 128 == 0) and (TH % 8 == 0)

    # Row halos are fetched as sublane-aligned 8-row blocks containing the
    # single row above/below the tile; content is masked in-kernel at the
    # image boundaries, so the clamped index maps never go out of bounds.
    if NT > 1:
        halo_rows = 8
        thb = TH // 8                  # tile height in 8-row blocks
        nrb = H // 8                   # number of 8-row blocks in the image
        top_map = lambda b, t: (b, 0, jnp.maximum(t * thb - 1, 0), 0)
        bot_map = lambda b, t: (b, 0, jnp.minimum((t + 1) * thb, nrb - 1), 0)
    else:
        halo_rows = 8 if (H >= 8 and H % 8 == 0) else H
        top_map = lambda b, t: (b, 0, 0, 0)
        bot_map = lambda b, t: (b, 0, 0, 0)

    kernel = functools.partial(_red_kernel, num_row_tiles=NT,
                               halo_rows=halo_rows, use_roll=use_roll)

    partials = pl.pallas_call(
        kernel,
        out_shape=jax.ShapeDtypeStruct((B, 1, 1), jnp.float32),
        grid=(B, NT),
        in_specs=[
            pl.BlockSpec(memory_space=pltpu.MemorySpace.SMEM),       # weights
            pl.BlockSpec(memory_space=pltpu.MemorySpace.SMEM),       # bias
            pl.BlockSpec((None, C, TH, W), lambda b, t: (b, 0, t, 0)),
            pl.BlockSpec((None, C, halo_rows, W), top_map),
            pl.BlockSpec((None, C, halo_rows, W), bot_map),
        ],
        out_specs=pl.BlockSpec((1, 1, 1), lambda b, t: (b, 0, 0)),
        scratch_shapes=[pltpu.VMEM((TH, W), jnp.float32)],
        compiler_params=pltpu.CompilerParams(
            # B is "parallel" (per-batch partials; feeds both TCs on v7x),
            # the row-tile axis drives the running accumulator ("arbitrary").
            # TODO: when B == 1 on v7x, add a second parallel axis over
            # row-tile chunks so both TensorCores stay busy.
            dimension_semantics=("parallel", "arbitrary"),
            vmem_limit_bytes=vmem_limit,
        ),
    )(w_flat, b_vec, x, x, x)

    # Cheap final reduce + 0.5*lambda scaling on the host/XLA side.
    return lambda_reg * 0.5 * jnp.sum(partials)


def red_reference(x_nchw, weight_oihw, bias, lambda_reg=1.0):
    """Pure-JAX reference (mirrors the PyTorch forward)."""
    rec = lax.conv_general_dilated(
        x_nchw, weight_oihw, window_strides=(1, 1), padding="SAME",
        dimension_numbers=("NCHW", "OIHW", "NCHW"))
    rec = rec + bias.reshape(1, -1, 1, 1)
    diff = x_nchw - rec
    return lambda_reg * 0.5 * jnp.sum(x_nchw * diff)


if __name__ == "__main__":
    B, C, H, W = 2, 4, 16, 16
    lambda_reg = 1.0

    key = jax.random.PRNGKey(0)
    k_x, k_w, k_b = jax.random.split(key, 3)
    x = jax.random.normal(k_x, (B, C, H, W), dtype=jnp.float32)
    # Deterministic synthetic "trained denoiser" parameters (single 3x3 conv).
    weight = 0.1 * jax.random.normal(k_w, (C, C, 3, 3), dtype=jnp.float32)   # OIHW
    bias = 0.05 * jax.random.normal(k_b, (C,), dtype=jnp.float32)

    want = jax.block_until_ready(red_reference(x, weight, bias, lambda_reg))

    # Multi-tile path (2 row tiles -> exercises halos + running accumulator).
    got_tiled = jax.block_until_ready(
        red_regularizer(x, weight, bias, lambda_reg, tile_rows=8))
    assert np.allclose(np.asarray(got_tiled), np.asarray(want),
                       rtol=1e-3, atol=1e-3), (got_tiled, want)

    # Auto tile-size path (single whole-image tile at this small size).
    got_auto = jax.block_until_ready(
        red_regularizer(x, weight, bias, lambda_reg))
    assert np.allclose(np.asarray(got_auto), np.asarray(want),
                       rtol=1e-3, atol=1e-3), (got_auto, want)

    print("KERNEL_OK")
</pallas_src>

<mosaic_0001>
module attributes {stable_mosaic.version = 11 : i64} {
  func.func @_red_kernel(%arg0: i32, %arg1: i32, %arg2: memref<144xf32, #tpu.memory_space<smem>>, %arg3: memref<4xf32, #tpu.memory_space<smem>>, %arg4: memref<1x4x8x16xf32, #tpu.memory_space<vmem>>, %arg5: memref<1x4x8x16xf32, #tpu.memory_space<vmem>>, %arg6: memref<1x4x8x16xf32, #tpu.memory_space<vmem>>, %arg7: memref<1x1x1xf32, #tpu.memory_space<vmem>>, %arg8: memref<8x16xf32, #tpu.memory_space<vmem>>) attributes {dimension_semantics = [#tpu.dimension_semantics<parallel>, #tpu.dimension_semantics<arbitrary>], iteration_bounds = array<i64: 2, 2>, scalar_prefetch = 0 : i64, scratch_operands = 1 : i64, tpu.core_type = #tpu.core_type<tc>, window_params = [{transform_indices = @transform_0, window_bounds = array<i64: 144>}, {transform_indices = @transform_1, window_bounds = array<i64: 4>}, {transform_indices = @transform_2, window_bounds = array<i64: 1, 4, 8, 16>}, {transform_indices = @transform_3, window_bounds = array<i64: 1, 4, 8, 16>}, {transform_indices = @transform_4, window_bounds = array<i64: 1, 4, 8, 16>}, {transform_indices = @transform_5, window_bounds = array<i64: 1, 1, 1>}]} {
    %c0 = arith.constant 0 : index
    %c0_0 = arith.constant 0 : index
    %c0_1 = arith.constant 0 : index
    %c0_2 = arith.constant 0 : index
    %0 = vector.load %arg4[%c0, %c0_0, %c0_1, %c0_2] : memref<1x4x8x16xf32, #tpu.memory_space<vmem>>, vector<1x4x8x16xf32>
    %1 = vector.shape_cast %0 : vector<1x4x8x16xf32> to vector<4x8x16xf32>
    %c0_i32 = arith.constant 0 : i32
    %2 = arith.cmpi sgt, %arg1, %c0_i32 : i32
    %c0_3 = arith.constant 0 : index
    %c0_4 = arith.constant 0 : index
    %c7 = arith.constant 7 : index
    %c0_5 = arith.constant 0 : index
    %3 = vector.load %arg5[%c0_3, %c0_4, %c7, %c0_5] : memref<1x4x8x16xf32, #tpu.memory_space<vmem>>, vector<1x4x1x16xf32>
    %4 = vector.shape_cast %3 : vector<1x4x1x16xf32> to vector<4x1x16xf32>
    %cst = arith.constant 0.000000e+00 : f32
    %5 = vector.broadcast %cst : f32 to vector<4x1x16xf32>
    %6 = arith.select %2, %4, %5 : vector<4x1x16xf32>
    %c1_i32 = arith.constant 1 : i32
    %7 = arith.cmpi slt, %arg1, %c1_i32 : i32
    %c0_6 = arith.constant 0 : index
    %c0_7 = arith.constant 0 : index
    %c0_8 = arith.constant 0 : index
    %c0_9 = arith.constant 0 : index
    %8 = vector.load %arg6[%c0_6, %c0_7, %c0_8, %c0_9] : memref<1x4x8x16xf32, #tpu.memory_space<vmem>>, vector<1x4x1x16xf32>
    %9 = vector.shape_cast %8 : vector<1x4x1x16xf32> to vector<4x1x16xf32>
    %cst_10 = arith.constant 0.000000e+00 : f32
    %10 = vector.broadcast %cst_10 : f32 to vector<4x1x16xf32>
    %11 = arith.select %7, %9, %10 : vector<4x1x16xf32>
    %12 = vector.extract_strided_slice %1 {offsets = [0, 0, 0], sizes = [4, 7, 16], strides = [1, 1, 1]} : vector<4x8x16xf32> to vector<4x7x16xf32>
    %13 = tpu.concatenate %6, %12 in 1 : vector<4x1x16xf32>, vector<4x7x16xf32> -> vector<4x8x16xf32>
    %14 = vector.extract_strided_slice %1 {offsets = [0, 1, 0], sizes = [4, 7, 16], strides = [1, 1, 1]} : vector<4x8x16xf32> to vector<4x7x16xf32>
    %15 = tpu.concatenate %14, %11 in 1 : vector<4x7x16xf32>, vector<4x1x16xf32> -> vector<4x8x16xf32>
    %cst_11 = arith.constant 0.000000e+00 : f32
    %16 = vector.broadcast %cst_11 : f32 to vector<4x8x1xf32>
    %17 = vector.extract_strided_slice %13 {offsets = [0, 0, 0], sizes = [4, 8, 15], strides = [1, 1, 1]} : vector<4x8x16xf32> to vector<4x8x15xf32>
    %18 = tpu.concatenate %16, %17 in 2 : vector<4x8x1xf32>, vector<4x8x15xf32> -> vector<4x8x16xf32>
    %cst_12 = arith.constant 0.000000e+00 : f32
    %19 = vector.broadcast %cst_12 : f32 to vector<4x8x1xf32>
    %20 = vector.extract_strided_slice %13 {offsets = [0, 0, 1], sizes = [4, 8, 15], strides = [1, 1, 1]} : vector<4x8x16xf32> to vector<4x8x15xf32>
    %21 = tpu.concatenate %20, %19 in 2 : vector<4x8x15xf32>, vector<4x8x1xf32> -> vector<4x8x16xf32>
    %cst_13 = arith.constant 0.000000e+00 : f32
    %22 = vector.broadcast %cst_13 : f32 to vector<4x8x1xf32>
    %23 = vector.extract_strided_slice %1 {offsets = [0, 0, 0], sizes = [4, 8, 15], strides = [1, 1, 1]} : vector<4x8x16xf32> to vector<4x8x15xf32>
    %24 = tpu.concatenate %22, %23 in 2 : vector<4x8x1xf32>, vector<4x8x15xf32> -> vector<4x8x16xf32>
    %cst_14 = arith.constant 0.000000e+00 : f32
    %25 = vector.broadcast %cst_14 : f32 to vector<4x8x1xf32>
    %26 = vector.extract_strided_slice %1 {offsets = [0, 0, 1], sizes = [4, 8, 15], strides = [1, 1, 1]} : vector<4x8x16xf32> to vector<4x8x15xf32>
    %27 = tpu.concatenate %26, %25 in 2 : vector<4x8x15xf32>, vector<4x8x1xf32> -> vector<4x8x16xf32>
    %cst_15 = arith.constant 0.000000e+00 : f32
    %28 = vector.broadcast %cst_15 : f32 to vector<4x8x1xf32>
    %29 = vector.extract_strided_slice %15 {offsets = [0, 0, 0], sizes = [4, 8, 15], strides = [1, 1, 1]} : vector<4x8x16xf32> to vector<4x8x15xf32>
    %30 = tpu.concatenate %28, %29 in 2 : vector<4x8x1xf32>, vector<4x8x15xf32> -> vector<4x8x16xf32>
    %cst_16 = arith.constant 0.000000e+00 : f32
    %31 = vector.broadcast %cst_16 : f32 to vector<4x8x1xf32>
    %32 = vector.extract_strided_slice %15 {offsets = [0, 0, 1], sizes = [4, 8, 15], strides = [1, 1, 1]} : vector<4x8x16xf32> to vector<4x8x15xf32>
    %33 = tpu.concatenate %32, %31 in 2 : vector<4x8x15xf32>, vector<4x8x1xf32> -> vector<4x8x16xf32>
    %cst_17 = arith.constant 0.000000e+00 : f32
    %34 = vector.broadcast %cst_17 : f32 to vector<8x16xf32>
    %35 = vector.extract_strided_slice %1 {offsets = [0, 0, 0], sizes = [1, 8, 16], strides = [1, 1, 1]} : vector<4x8x16xf32> to vector<1x8x16xf32>
    %36 = vector.shape_cast %35 : vector<1x8x16xf32> to vector<8x16xf32>
    %c0_18 = arith.constant 0 : index
    %37 = memref.load %arg3[%c0_18] : memref<4xf32, #tpu.memory_space<smem>>
    %38 = vector.broadcast %37 : f32 to vector<8x16xf32>
    %39 = arith.subf %36, %38 : vector<8x16xf32>
    %c0_19 = arith.constant 0 : index
    %40 = memref.load %arg2[%c0_19] : memref<144xf32, #tpu.memory_space<smem>>
    %41 = vector.extract_strided_slice %18 {offsets = [0, 0, 0], sizes = [1, 8, 16], strides = [1, 1, 1]} : vector<4x8x16xf32> to vector<1x8x16xf32>
    %42 = vector.shape_cast %41 : vector<1x8x16xf32> to vector<8x16xf32>
    %43 = vector.broadcast %40 : f32 to vector<8x16xf32>
    %44 = arith.mulf %43, %42 : vector<8x16xf32>
    %45 = arith.subf %39, %44 : vector<8x16xf32>
    %c9 = arith.constant 9 : index
    %46 = memref.load %arg2[%c9] : memref<144xf32, #tpu.memory_space<smem>>
    %47 = vector.extract_strided_slice %18 {offsets = [1, 0, 0], sizes = [1, 8, 16], strides = [1, 1, 1]} : vector<4x8x16xf32> to vector<1x8x16xf32>
    %48 = vector.shape_cast %47 : vector<1x8x16xf32> to vector<8x16xf32>
    %49 = vector.broadcast %46 : f32 to vector<8x16xf32>
    %50 = arith.mulf %49, %48 : vector<8x16xf32>
    %51 = arith.subf %45, %50 : vector<8x16xf32>
    %c18 = arith.constant 18 : index
    %52 = memref.load %arg2[%c18] : memref<144xf32, #tpu.memory_space<smem>>
    %53 = vector.extract_strided_slice %18 {offsets = [2, 0, 0], sizes = [1, 8, 16], strides = [1, 1, 1]} : vector<4x8x16xf32> to vector<1x8x16xf32>
    %54 = vector.shape_cast %53 : vector<1x8x16xf32> to vector<8x16xf32>
    %55 = vector.broadcast %52 : f32 to vector<8x16xf32>
    %56 = arith.mulf %55, %54 : vector<8x16xf32>
    %57 = arith.subf %51, %56 : vector<8x16xf32>
    %c27 = arith.constant 27 : index
    %58 = memref.load %arg2[%c27] : memref<144xf32, #tpu.memory_space<smem>>
    %59 = vector.extract_strided_slice %18 {offsets = [3, 0, 0], sizes = [1, 8, 16], strides = [1, 1, 1]} : vector<4x8x16xf32> to vector<1x8x16xf32>
    %60 = vector.shape_cast %59 : vector<1x8x16xf32> to vector<8x16xf32>
    %61 = vector.broadcast %58 : f32 to vector<8x16xf32>
    %62 = arith.mulf %61, %60 : vector<8x16xf32>
    %63 = arith.subf %57, %62 : vector<8x16xf32>
    %c1 = arith.constant 1 : index
    %64 = memref.load %arg2[%c1] : memref<144xf32, #tpu.memory_space<smem>>
    %65 = vector.extract_strided_slice %13 {offsets = [0, 0, 0], sizes = [1, 8, 16], strides = [1, 1, 1]} : vector<4x8x16xf32> to vector<1x8x16xf32>
    %66 = vector.shape_cast %65 : vector<1x8x16xf32> to vector<8x16xf32>
    %67 = vector.broadcast %64 : f32 to vector<8x16xf32>
    %68 = arith.mulf %67, %66 : vector<8x16xf32>
    %69 = arith.subf %63, %68 : vector<8x16xf32>
    %c10 = arith.constant 10 : index
    %70 = memref.load %arg2[%c10] : memref<144xf32, #tpu.memory_space<smem>>
    %71 = vector.extract_strided_slice %13 {offsets = [1, 0, 0], sizes = [1, 8, 16], strides = [1, 1, 1]} : vector<4x8x16xf32> to vector<1x8x16xf32>
    %72 = vector.shape_cast %71 : vector<1x8x16xf32> to vector<8x16xf32>
    %73 = vector.broadcast %70 : f32 to vector<8x16xf32>
    %74 = arith.mulf %73, %72 : vector<8x16xf32>
    %75 = arith.subf %69, %74 : vector<8x16xf32>
    %c19 = arith.constant 19 : index
    %76 = memref.load %arg2[%c19] : memref<144xf32, #tpu.memory_space<smem>>
    %77 = vector.extract_strided_slice %13 {offsets = [2, 0, 0], sizes = [1, 8, 16], strides = [1, 1, 1]} : vector<4x8x16xf32> to vector<1x8x16xf32>
    %78 = vector.shape_cast %77 : vector<1x8x16xf32> to vector<8x16xf32>
    %79 = vector.broadcast %76 : f32 to vector<8x16xf32>
    %80 = arith.mulf %79, %78 : vector<8x16xf32>
    %81 = arith.subf %75, %80 : vector<8x16xf32>
    %c28 = arith.constant 28 : index
    %82 = memref.load %arg2[%c28] : memref<144xf32, #tpu.memory_space<smem>>
    %83 = vector.extract_strided_slice %13 {offsets = [3, 0, 0], sizes = [1, 8, 16], strides = [1, 1, 1]} : vector<4x8x16xf32> to vector<1x8x16xf32>
    %84 = vector.shape_cast %83 : vector<1x8x16xf32> to vector<8x16xf32>
    %85 = vector.broadcast %82 : f32 to vector<8x16xf32>
    %86 = arith.mulf %85, %84 : vector<8x16xf32>
    %87 = arith.subf %81, %86 : vector<8x16xf32>
    %c2 = arith.constant 2 : index
    %88 = memref.load %arg2[%c2] : memref<144xf32, #tpu.memory_space<smem>>
    %89 = vector.extract_strided_slice %21 {offsets = [0, 0, 0], sizes = [1, 8, 16], strides = [1, 1, 1]} : vector<4x8x16xf32> to vector<1x8x16xf32>
    %90 = vector.shape_cast %89 : vector<1x8x16xf32> to vector<8x16xf32>
    %91 = vector.broadcast %88 : f32 to vector<8x16xf32>
    %92 = arith.mulf %91, %90 : vector<8x16xf32>
    %93 = arith.subf %87, %92 : vector<8x16xf32>
    %c11 = arith.constant 11 : index
    %94 = memref.load %arg2[%c11] : memref<144xf32, #tpu.memory_space<smem>>
    %95 = vector.extract_strided_slice %21 {offsets = [1, 0, 0], sizes = [1, 8, 16], strides = [1, 1, 1]} : vector<4x8x16xf32> to vector<1x8x16xf32>
    %96 = vector.shape_cast %95 : vector<1x8x16xf32> to vector<8x16xf32>
    %97 = vector.broadcast %94 : f32 to vector<8x16xf32>
    %98 = arith.mulf %97, %96 : vector<8x16xf32>
    %99 = arith.subf %93, %98 : vector<8x16xf32>
    %c20 = arith.constant 20 : index
    %100 = memref.load %arg2[%c20] : memref<144xf32, #tpu.memory_space<smem>>
    %101 = vector.extract_strided_slice %21 {offsets = [2, 0, 0], sizes = [1, 8, 16], strides = [1, 1, 1]} : vector<4x8x16xf32> to vector<1x8x16xf32>
    %102 = vector.shape_cast %101 : vector<1x8x16xf32> to vector<8x16xf32>
    %103 = vector.broadcast %100 : f32 to vector<8x16xf32>
    %104 = arith.mulf %103, %102 : vector<8x16xf32>
    %105 = arith.subf %99, %104 : vector<8x16xf32>
    %c29 = arith.constant 29 : index
    %106 = memref.load %arg2[%c29] : memref<144xf32, #tpu.memory_space<smem>>
    %107 = vector.extract_strided_slice %21 {offsets = [3, 0, 0], sizes = [1, 8, 16], strides = [1, 1, 1]} : vector<4x8x16xf32> to vector<1x8x16xf32>
    %108 = vector.shape_cast %107 : vector<1x8x16xf32> to vector<8x16xf32>
    %109 = vector.broadcast %106 : f32 to vector<8x16xf32>
    %110 = arith.mulf %109, %108 : vector<8x16xf32>
    %111 = arith.subf %105, %110 : vector<8x16xf32>
    %c3 = arith.constant 3 : index
    %112 = memref.load %arg2[%c3] : memref<144xf32, #tpu.memory_space<smem>>
    %113 = vector.extract_strided_slice %24 {offsets = [0, 0, 0], sizes = [1, 8, 16], strides = [1, 1, 1]} : vector<4x8x16xf32> to vector<1x8x16xf32>
    %114 = vector.shape_cast %113 : vector<1x8x16xf32> to vector<8x16xf32>
    %115 = vector.broadcast %112 : f32 to vector<8x16xf32>
    %116 = arith.mulf %115, %114 : vector<8x16xf32>
    %117 = arith.subf %111, %116 : vector<8x16xf32>
    %c12 = arith.constant 12 : index
    %118 = memref.load %arg2[%c12] : memref<144xf32, #tpu.memory_space<smem>>
    %119 = vector.extract_strided_slice %24 {offsets = [1, 0, 0], sizes = [1, 8, 16], strides = [1, 1, 1]} : vector<4x8x16xf32> to vector<1x8x16xf32>
    %120 = vector.shape_cast %119 : vector<1x8x16xf32> to vector<8x16xf32>
    %121 = vector.broadcast %118 : f32 to vector<8x16xf32>
    %122 = arith.mulf %121, %120 : vector<8x16xf32>
    %123 = arith.subf %117, %122 : vector<8x16xf32>
    %c21 = arith.constant 21 : index
    %124 = memref.load %arg2[%c21] : memref<144xf32, #tpu.memory_space<smem>>
    %125 = vector.extract_strided_slice %24 {offsets = [2, 0, 0], sizes = [1, 8, 16], strides = [1, 1, 1]} : vector<4x8x16xf32> to vector<1x8x16xf32>
    %126 = vector.shape_cast %125 : vector<1x8x16xf32> to vector<8x16xf32>
    %127 = vector.broadcast %124 : f32 to vector<8x16xf32>
    %128 = arith.mulf %127, %126 : vector<8x16xf32>
    %129 = arith.subf %123, %128 : vector<8x16xf32>
    %c30 = arith.constant 30 : index
    %130 = memref.load %arg2[%c30] : memref<144xf32, #tpu.memory_space<smem>>
    %131 = vector.extract_strided_slice %24 {offsets = [3, 0, 0], sizes = [1, 8, 16], strides = [1, 1, 1]} : vector<4x8x16xf32> to vector<1x8x16xf32>
    %132 = vector.shape_cast %131 : vector<1x8x16xf32> to vector<8x16xf32>
    %133 = vector.broadcast %130 : f32 to vector<8x16xf32>
    %134 = arith.mulf %133, %132 : vector<8x16xf32>
    %135 = arith.subf %129, %134 : vector<8x16xf32>
    %c4 = arith.constant 4 : index
    %136 = memref.load %arg2[%c4] : memref<144xf32, #tpu.memory_space<smem>>
    %137 = vector.extract_strided_slice %1 {offsets = [0, 0, 0], sizes = [1, 8, 16], strides = [1, 1, 1]} : vector<4x8x16xf32> to vector<1x8x16xf32>
    %138 = vector.shape_cast %137 : vector<1x8x16xf32> to vector<8x16xf32>
    %139 = vector.broadcast %136 : f32 to vector<8x16xf32>
    %140 = arith.mulf %139, %138 : vector<8x16xf32>
    %141 = arith.subf %135, %140 : vector<8x16xf32>
    %c13 = arith.constant 13 : index
    %142 = memref.load %arg2[%c13] : memref<144xf32, #tpu.memory_space<smem>>
    %143 = vector.extract_strided_slice %1 {offsets = [1, 0, 0], sizes = [1, 8, 16], strides = [1, 1, 1]} : vector<4x8x16xf32> to vector<1x8x16xf32>
    %144 = vector.shape_cast %143 : vector<1x8x16xf32> to vector<8x16xf32>
    %145 = vector.broadcast %142 : f32 to vector<8x16xf32>
    %146 = arith.mulf %145, %144 : vector<8x16xf32>
    %147 = arith.subf %141, %146 : vector<8x16xf32>
    %c22 = arith.constant 22 : index
    %148 = memref.load %arg2[%c22] : memref<144xf32, #tpu.memory_space<smem>>
    %149 = vector.extract_strided_slice %1 {offsets = [2, 0, 0], sizes = [1, 8, 16], strides = [1, 1, 1]} : vector<4x8x16xf32> to vector<1x8x16xf32>
    %150 = vector.shape_cast %149 : vector<1x8x16xf32> to vector<8x16xf32>
    %151 = vector.broadcast %148 : f32 to vector<8x16xf32>
    %152 = arith.mulf %151, %150 : vector<8x16xf32>
    %153 = arith.subf %147, %152 : vector<8x16xf32>
    %c31 = arith.constant 31 : index
    %154 = memref.load %arg2[%c31] : memref<144xf32, #tpu.memory_space<smem>>
    %155 = vector.extract_strided_slice %1 {offsets = [3, 0, 0], sizes = [1, 8, 16], strides = [1, 1, 1]} : vector<4x8x16xf32> to vector<1x8x16xf32>
    %156 = vector.shape_cast %155 : vector<1x8x16xf32> to vector<8x16xf32>
    %157 = vector.broadcast %154 : f32 to vector<8x16xf32>
    %158 = arith.mulf %157, %156 : vector<8x16xf32>
    %159 = arith.subf %153, %158 : vector<8x16xf32>
    %c5 = arith.constant 5 : index
    %160 = memref.load %arg2[%c5] : memref<144xf32, #tpu.memory_space<smem>>
    %161 = vector.extract_strided_slice %27 {offsets = [0, 0, 0], sizes = [1, 8, 16], strides = [1, 1, 1]} : vector<4x8x16xf32> to vector<1x8x16xf32>
    %162 = vector.shape_cast %161 : vector<1x8x16xf32> to vector<8x16xf32>
    %163 = vector.broadcast %160 : f32 to vector<8x16xf32>
    %164 = arith.mulf %163, %162 : vector<8x16xf32>
    %165 = arith.subf %159, %164 : vector<8x16xf32>
    %c14 = arith.constant 14 : index
    %166 = memref.load %arg2[%c14] : memref<144xf32, #tpu.memory_space<smem>>
    %167 = vector.extract_strided_slice %27 {offsets = [1, 0, 0], sizes = [1, 8, 16], strides = [1, 1, 1]} : vector<4x8x16xf32> to vector<1x8x16xf32>
    %168 = vector.shape_cast %167 : vector<1x8x16xf32> to vector<8x16xf32>
    %169 = vector.broadcast %166 : f32 to vector<8x16xf32>
    %170 = arith.mulf %169, %168 : vector<8x16xf32>
    %171 = arith.subf %165, %170 : vector<8x16xf32>
    %c23 = arith.constant 23 : index
    %172 = memref.load %arg2[%c23] : memref<144xf32, #tpu.memory_space<smem>>
    %173 = vector.extract_strided_slice %27 {offsets = [2, 0, 0], sizes = [1, 8, 16], strides = [1, 1, 1]} : vector<4x8x16xf32> to vector<1x8x16xf32>
    %174 = vector.shape_cast %173 : vector<1x8x16xf32> to vector<8x16xf32>
    %175 = vector.broadcast %172 : f32 to vector<8x16xf32>
    %176 = arith.mulf %175, %174 : vector<8x16xf32>
    %177 = arith.subf %171, %176 : vector<8x16xf32>
    %c32 = arith.constant 32 : index
    %178 = memref.load %arg2[%c32] : memref<144xf32, #tpu.memory_space<smem>>
    %179 = vector.extract_strided_slice %27 {offsets = [3, 0, 0], sizes = [1, 8, 16], strides = [1, 1, 1]} : vector<4x8x16xf32> to vector<1x8x16xf32>
    %180 = vector.shape_cast %179 : vector<1x8x16xf32> to vector<8x16xf32>
    %181 = vector.broadcast %178 : f32 to vector<8x16xf32>
    %182 = arith.mulf %181, %180 : vector<8x16xf32>
    %183 = arith.subf %177, %182 : vector<8x16xf32>
    %c6 = arith.constant 6 : index
    %184 = memref.load %arg2[%c6] : memref<144xf32, #tpu.memory_space<smem>>
    %185 = vector.extract_strided_slice %30 {offsets = [0, 0, 0], sizes = [1, 8, 16], strides = [1, 1, 1]} : vector<4x8x16xf32> to vector<1x8x16xf32>
    %186 = vector.shape_cast %185 : vector<1x8x16xf32> to vector<8x16xf32>
    %187 = vector.broadcast %184 : f32 to vector<8x16xf32>
    %188 = arith.mulf %187, %186 : vector<8x16xf32>
    %189 = arith.subf %183, %188 : vector<8x16xf32>
    %c15 = arith.constant 15 : index
    %190 = memref.load %arg2[%c15] : memref<144xf32, #tpu.memory_space<smem>>
    %191 = vector.extract_strided_slice %30 {offsets = [1, 0, 0], sizes = [1, 8, 16], strides = [1, 1, 1]} : vector<4x8x16xf32> to vector<1x8x16xf32>
    %192 = vector.shape_cast %191 : vector<1x8x16xf32> to vector<8x16xf32>
    %193 = vector.broadcast %190 : f32 to vector<8x16xf32>
    %194 = arith.mulf %193, %192 : vector<8x16xf32>
    %195 = arith.subf %189, %194 : vector<8x16xf32>
    %c24 = arith.constant 24 : index
    %196 = memref.load %arg2[%c24] : memref<144xf32, #tpu.memory_space<smem>>
    %197 = vector.extract_strided_slice %30 {offsets = [2, 0, 0], sizes = [1, 8, 16], strides = [1, 1, 1]} : vector<4x8x16xf32> to vector<1x8x16xf32>
    %198 = vector.shape_cast %197 : vector<1x8x16xf32> to vector<8x16xf32>
    %199 = vector.broadcast %196 : f32 to vector<8x16xf32>
    %200 = arith.mulf %199, %198 : vector<8x16xf32>
    %201 = arith.subf %195, %200 : vector<8x16xf32>
    %c33 = arith.constant 33 : index
    %202 = memref.load %arg2[%c33] : memref<144xf32, #tpu.memory_space<smem>>
    %203 = vector.extract_strided_slice %30 {offsets = [3, 0, 0], sizes = [1, 8, 16], strides = [1, 1, 1]} : vector<4x8x16xf32> to vector<1x8x16xf32>
    %204 = vector.shape_cast %203 : vector<1x8x16xf32> to vector<8x16xf32>
    %205 = vector.broadcast %202 : f32 to vector<8x16xf32>
    %206 = arith.mulf %205, %204 : vector<8x16xf32>
    %207 = arith.subf %201, %206 : vector<8x16xf32>
    %c7_20 = arith.constant 7 : index
    %208 = memref.load %arg2[%c7_20] : memref<144xf32, #tpu.memory_space<smem>>
    %209 = vector.extract_strided_slice %15 {offsets = [0, 0, 0], sizes = [1, 8, 16], strides = [1, 1, 1]} : vector<4x8x16xf32> to vector<1x8x16xf32>
    %210 = vector.shape_cast %209 : vector<1x8x16xf32> to vector<8x16xf32>
    %211 = vector.broadcast %208 : f32 to vector<8x16xf32>
    %212 = arith.mulf %211, %210 : vector<8x16xf32>
    %213 = arith.subf %207, %212 : vector<8x16xf32>
    %c16 = arith.constant 16 : index
    %214 = memref.load %arg2[%c16] : memref<144xf32, #tpu.memory_space<smem>>
    %215 = vector.extract_strided_slice %15 {offsets = [1, 0, 0], sizes = [1, 8, 16], strides = [1, 1, 1]} : vector<4x8x16xf32> to vector<1x8x16xf32>
    %216 = vector.shape_cast %215 : vector<1x8x16xf32> to vector<8x16xf32>
    %217 = vector.broadcast %214 : f32 to vector<8x16xf32>
    %218 = arith.mulf %217, %216 : vector<8x16xf32>
    %219 = arith.subf %213, %218 : vector<8x16xf32>
    %c25 = arith.constant 25 : index
    %220 = memref.load %arg2[%c25] : memref<144xf32, #tpu.memory_space<smem>>
    %221 = vector.extract_strided_slice %15 {offsets = [2, 0, 0], sizes = [1, 8, 16], strides = [1, 1, 1]} : vector<4x8x16xf32> to vector<1x8x16xf32>
    %222 = vector.shape_cast %221 : vector<1x8x16xf32> to vector<8x16xf32>
    %223 = vector.broadcast %220 : f32 to vector<8x16xf32>
    %224 = arith.mulf %223, %222 : vector<8x16xf32>
    %225 = arith.subf %219, %224 : vector<8x16xf32>
    %c34 = arith.constant 34 : index
    %226 = memref.load %arg2[%c34] : memref<144xf32, #tpu.memory_space<smem>>
    %227 = vector.extract_strided_slice %15 {offsets = [3, 0, 0], sizes = [1, 8, 16], strides = [1, 1, 1]} : vector<4x8x16xf32> to vector<1x8x16xf32>
    %228 = vector.shape_cast %227 : vector<1x8x16xf32> to vector<8x16xf32>
    %229 = vector.broadcast %226 : f32 to vector<8x16xf32>
    %230 = arith.mulf %229, %228 : vector<8x16xf32>
    %231 = arith.subf %225, %230 : vector<8x16xf32>
    %c8 = arith.constant 8 : index
    %232 = memref.load %arg2[%c8] : memref<144xf32, #tpu.memory_space<smem>>
    %233 = vector.extract_strided_slice %33 {offsets = [0, 0, 0], sizes = [1, 8, 16], strides = [1, 1, 1]} : vector<4x8x16xf32> to vector<1x8x16xf32>
    %234 = vector.shape_cast %233 : vector<1x8x16xf32> to vector<8x16xf32>
    %235 = vector.broadcast %232 : f32 to vector<8x16xf32>
    %236 = arith.mulf %235, %234 : vector<8x16xf32>
    %237 = arith.subf %231, %236 : vector<8x16xf32>
    %c17 = arith.constant 17 : index
    %238 = memref.load %arg2[%c17] : memref<144xf32, #tpu.memory_space<smem>>
    %239 = vector.extract_strided_slice %33 {offsets = [1, 0, 0], sizes = [1, 8, 16], strides = [1, 1, 1]} : vector<4x8x16xf32> to vector<1x8x16xf32>
    %240 = vector.shape_cast %239 : vector<1x8x16xf32> to vector<8x16xf32>
    %241 = vector.broadcast %238 : f32 to vector<8x16xf32>
    %242 = arith.mulf %241, %240 : vector<8x16xf32>
    %243 = arith.subf %237, %242 : vector<8x16xf32>
    %c26 = arith.constant 26 : index
    %244 = memref.load %arg2[%c26] : memref<144xf32, #tpu.memory_space<smem>>
    %245 = vector.extract_strided_slice %33 {offsets = [2, 0, 0], sizes = [1, 8, 16], strides = [1, 1, 1]} : vector<4x8x16xf32> to vector<1x8x16xf32>
    %246 = vector.shape_cast %245 : vector<1x8x16xf32> to vector<8x16xf32>
    %247 = vector.broadcast %244 : f32 to vector<8x16xf32>
    %248 = arith.mulf %247, %246 : vector<8x16xf32>
    %249 = arith.subf %243, %248 : vector<8x16xf32>
    %c35 = arith.constant 35 : index
    %250 = memref.load %arg2[%c35] : memref<144xf32, #tpu.memory_space<smem>>
    %251 = vector.extract_strided_slice %33 {offsets = [3, 0, 0], sizes = [1, 8, 16], strides = [1, 1, 1]} : vector<4x8x16xf32> to vector<1x8x16xf32>
    %252 = vector.shape_cast %251 : vector<1x8x16xf32> to vector<8x16xf32>
    %253 = vector.broadcast %250 : f32 to vector<8x16xf32>
    %254 = arith.mulf %253, %252 : vector<8x16xf32>
    %255 = arith.subf %249, %254 : vector<8x16xf32>
    %256 = arith.mulf %36, %255 : vector<8x16xf32>
    %257 = arith.addf %34, %256 : vector<8x16xf32>
    %258 = vector.extract_strided_slice %1 {offsets = [1, 0, 0], sizes = [1, 8, 16], strides = [1, 1, 1]} : vector<4x8x16xf32> to vector<1x8x16xf32>
    %259 = vector.shape_cast %258 : vector<1x8x16xf32> to vector<8x16xf32>
    %c1_21 = arith.constant 1 : index
    %260 = memref.load %arg3[%c1_21] : memref<4xf32, #tpu.memory_space<smem>>
    %261 = vector.broadcast %260 : f32 to vector<8x16xf32>
    %262 = arith.subf %259, %261 : vector<8x16xf32>
    %c36 = arith.constant 36 : index
    %263 = memref.load %arg2[%c36] : memref<144xf32, #tpu.memory_space<smem>>
    %264 = vector.extract_strided_slice %18 {offsets = [0, 0, 0], sizes = [1, 8, 16], strides = [1, 1, 1]} : vector<4x8x16xf32> to vector<1x8x16xf32>
    %265 = vector.shape_cast %264 : vector<1x8x16xf32> to vector<8x16xf32>
    %266 = vector.broadcast %263 : f32 to vector<8x16xf32>
    %267 = arith.mulf %266, %265 : vector<8x16xf32>
    %268 = arith.subf %262, %267 : vector<8x16xf32>
    %c45 = arith.constant 45 : index
    %269 = memref.load %arg2[%c45] : memref<144xf32, #tpu.memory_space<smem>>
    %270 = vector.extract_strided_slice %18 {offsets = [1, 0, 0], sizes = [1, 8, 16], strides = [1, 1, 1]} : vector<4x8x16xf32> to vector<1x8x16xf32>
    %271 = vector.shape_cast %270 : vector<1x8x16xf32> to vector<8x16xf32>
    %272 = vector.broadcast %269 : f32 to vector<8x16xf32>
    %273 = arith.mulf %272, %271 : vector<8x16xf32>
    %274 = arith.subf %268, %273 : vector<8x16xf32>
    %c54 = arith.constant 54 : index
    %275 = memref.load %arg2[%c54] : memref<144xf32, #tpu.memory_space<smem>>
    %276 = vector.extract_strided_slice %18 {offsets = [2, 0, 0], sizes = [1, 8, 16], strides = [1, 1, 1]} : vector<4x8x16xf32> to vector<1x8x16xf32>
    %277 = vector.shape_cast %276 : vector<1x8x16xf32> to vector<8x16xf32>
    %278 = vector.broadcast %275 : f32 to vector<8x16xf32>
    %279 = arith.mulf %278, %277 : vector<8x16xf32>
    %280 = arith.subf %274, %279 : vector<8x16xf32>
    %c63 = arith.constant 63 : index
    %281 = memref.load %arg2[%c63] : memref<144xf32, #tpu.memory_space<smem>>
    %282 = vector.extract_strided_slice %18 {offsets = [3, 0, 0], sizes = [1, 8, 16], strides = [1, 1, 1]} : vector<4x8x16xf32> to vector<1x8x16xf32>
    %283 = vector.shape_cast %282 : vector<1x8x16xf32> to vector<8x16xf32>
    %284 = vector.broadcast %281 : f32 to vector<8x16xf32>
    %285 = arith.mulf %284, %283 : vector<8x16xf32>
    %286 = arith.subf %280, %285 : vector<8x16xf32>
    %c37 = arith.constant 37 : index
    %287 = memref.load %arg2[%c37] : memref<144xf32, #tpu.memory_space<smem>>
    %288 = vector.extract_strided_slice %13 {offsets = [0, 0, 0], sizes = [1, 8, 16], strides = [1, 1, 1]} : vector<4x8x16xf32> to vector<1x8x16xf32>
    %289 = vector.shape_cast %288 : vector<1x8x16xf32> to vector<8x16xf32>
    %290 = vector.broadcast %287 : f32 to vector<8x16xf32>
    %291 = arith.mulf %290, %289 : vector<8x16xf32>
    %292 = arith.subf %286, %291 : vector<8x16xf32>
    %c46 = arith.constant 46 : index
    %293 = memref.load %arg2[%c46] : memref<144xf32, #tpu.memory_space<smem>>
    %294 = vector.extract_strided_slice %13 {offsets = [1, 0, 0], sizes = [1, 8, 16], strides = [1, 1, 1]} : vector<4x8x16xf32> to vector<1x8x16xf32>
    %295 = vector.shape_cast %294 : vector<1x8x16xf32> to vector<8x16xf32>
    %296 = vector.broadcast %293 : f32 to vector<8x16xf32>
    %297 = arith.mulf %296, %295 : vector<8x16xf32>
    %298 = arith.subf %292, %297 : vector<8x16xf32>
    %c55 = arith.constant 55 : index
    %299 = memref.load %arg2[%c55] : memref<144xf32, #tpu.memory_space<smem>>
    %300 = vector.extract_strided_slice %13 {offsets = [2, 0, 0], sizes = [1, 8, 16], strides = [1, 1, 1]} : vector<4x8x16xf32> to vector<1x8x16xf32>
    %301 = vector.shape_cast %300 : vector<1x8x16xf32> to vector<8x16xf32>
    %302 = vector.broadcast %299 : f32 to vector<8x16xf32>
    %303 = arith.mulf %302, %301 : vector<8x16xf32>
    %304 = arith.subf %298, %303 : vector<8x16xf32>
    %c64 = arith.constant 64 : index
    %305 = memref.load %arg2[%c64] : memref<144xf32, #tpu.memory_space<smem>>
    %306 = vector.extract_strided_slice %13 {offsets = [3, 0, 0], sizes = [1, 8, 16], strides = [1, 1, 1]} : vector<4x8x16xf32> to vector<1x8x16xf32>
    %307 = vector.shape_cast %306 : vector<1x8x16xf32> to vector<8x16xf32>
    %308 = vector.broadcast %305 : f32 to vector<8x16xf32>
    %309 = arith.mulf %308, %307 : vector<8x16xf32>
    %310 = arith.subf %304, %309 : vector<8x16xf32>
    %c38 = arith.constant 38 : index
    %311 = memref.load %arg2[%c38] : memref<144xf32, #tpu.memory_space<smem>>
    %312 = vector.extract_strided_slice %21 {offsets = [0, 0, 0], sizes = [1, 8, 16], strides = [1, 1, 1]} : vector<4x8x16xf32> to vector<1x8x16xf32>
    %313 = vector.shape_cast %312 : vector<1x8x16xf32> to vector<8x16xf32>
    %314 = vector.broadcast %311 : f32 to vector<8x16xf32>
    %315 = arith.mulf %314, %313 : vector<8x16xf32>
    %316 = arith.subf %310, %315 : vector<8x16xf32>
    %c47 = arith.constant 47 : index
    %317 = memref.load %arg2[%c47] : memref<144xf32, #tpu.memory_space<smem>>
    %318 = vector.extract_strided_slice %21 {offsets = [1, 0, 0], sizes = [1, 8, 16], strides = [1, 1, 1]} : vector<4x8x16xf32> to vector<1x8x16xf32>
    %319 = vector.shape_cast %318 : vector<1x8x16xf32> to vector<8x16xf32>
    %320 = vector.broadcast %317 : f32 to vector<8x16xf32>
    %321 = arith.mulf %320, %319 : vector<8x16xf32>
    %322 = arith.subf %316, %321 : vector<8x16xf32>
    %c56 = arith.constant 56 : index
    %323 = memref.load %arg2[%c56] : memref<144xf32, #tpu.memory_space<smem>>
    %324 = vector.extract_strided_slice %21 {offsets = [2, 0, 0], sizes = [1, 8, 16], strides = [1, 1, 1]} : vector<4x8x16xf32> to vector<1x8x16xf32>
    %325 = vector.shape_cast %324 : vector<1x8x16xf32> to vector<8x16xf32>
    %326 = vector.broadcast %323 : f32 to vector<8x16xf32>
    %327 = arith.mulf %326, %325 : vector<8x16xf32>
    %328 = arith.subf %322, %327 : vector<8x16xf32>
    %c65 = arith.constant 65 : index
    %329 = memref.load %arg2[%c65] : memref<144xf32, #tpu.memory_space<smem>>
    %330 = vector.extract_strided_slice %21 {offsets = [3, 0, 0], sizes = [1, 8, 16], strides = [1, 1, 1]} : vector<4x8x16xf32> to vector<1x8x16xf32>
    %331 = vector.shape_cast %330 : vector<1x8x16xf32> to vector<8x16xf32>
    %332 = vector.broadcast %329 : f32 to vector<8x16xf32>
    %333 = arith.mulf %332, %331 : vector<8x16xf32>
    %334 = arith.subf %328, %333 : vector<8x16xf32>
    %c39 = arith.constant 39 : index
    %335 = memref.load %arg2[%c39] : memref<144xf32, #tpu.memory_space<smem>>
    %336 = vector.extract_strided_slice %24 {offsets = [0, 0, 0], sizes = [1, 8, 16], strides = [1, 1, 1]} : vector<4x8x16xf32> to vector<1x8x16xf32>
    %337 = vector.shape_cast %336 : vector<1x8x16xf32> to vector<8x16xf32>
    %338 = vector.broadcast %335 : f32 to vector<8x16xf32>
    %339 = arith.mulf %338, %337 : vector<8x16xf32>
    %340 = arith.subf %334, %339 : vector<8x16xf32>
    %c48 = arith.constant 48 : index
    %341 = memref.load %arg2[%c48] : memref<144xf32, #tpu.memory_space<smem>>
    %342 = vector.extract_strided_slice %24 {offsets = [1, 0, 0], sizes = [1, 8, 16], strides = [1, 1, 1]} : vector<4x8x16xf32> to vector<1x8x16xf32>
    %343 = vector.shape_cast %342 : vector<1x8x16xf32> to vector<8x16xf32>
    %344 = vector.broadcast %341 : f32 to vector<8x16xf32>
    %345 = arith.mulf %344, %343 : vector<8x16xf32>
    %346 = arith.subf %340, %345 : vector<8x16xf32>
    %c57 = arith.constant 57 : index
    %347 = memref.load %arg2[%c57] : memref<144xf32, #tpu.memory_space<smem>>
    %348 = vector.extract_strided_slice %24 {offsets = [2, 0, 0], sizes = [1, 8, 16], strides = [1, 1, 1]} : vector<4x8x16xf32> to vector<1x8x16xf32>
    %349 = vector.shape_cast %348 : vector<1x8x16xf32> to vector<8x16xf32>
    %350 = vector.broadcast %347 : f32 to vector<8x16xf32>
    %351 = arith.mulf %350, %349 : vector<8x16xf32>
    %352 = arith.subf %346, %351 : vector<8x16xf32>
    %c66 = arith.constant 66 : index
    %353 = memref.load %arg2[%c66] : memref<144xf32, #tpu.memory_space<smem>>
    %354 = vector.extract_strided_slice %24 {offsets = [3, 0, 0], sizes = [1, 8, 16], strides = [1, 1, 1]} : vector<4x8x16xf32> to vector<1x8x16xf32>
    %355 = vector.shape_cast %354 : vector<1x8x16xf32> to vector<8x16xf32>
    %356 = vector.broadcast %353 : f32 to vector<8x16xf32>
    %357 = arith.mulf %356, %355 : vector<8x16xf32>
    %358 = arith.subf %352, %357 : vector<8x16xf32>
    %c40 = arith.constant 40 : index
    %359 = memref.load %arg2[%c40] : memref<144xf32, #tpu.memory_space<smem>>
    %360 = vector.extract_strided_slice %1 {offsets = [0, 0, 0], sizes = [1, 8, 16], strides = [1, 1, 1]} : vector<4x8x16xf32> to vector<1x8x16xf32>
    %361 = vector.shape_cast %360 : vector<1x8x16xf32> to vector<8x16xf32>
    %362 = vector.broadcast %359 : f32 to vector<8x16xf32>
    %363 = arith.mulf %362, %361 : vector<8x16xf32>
    %364 = arith.subf %358, %363 : vector<8x16xf32>
    %c49 = arith.constant 49 : index
    %365 = memref.load %arg2[%c49] : memref<144xf32, #tpu.memory_space<smem>>
    %366 = vector.extract_strided_slice %1 {offsets = [1, 0, 0], sizes = [1, 8, 16], strides = [1, 1, 1]} : vector<4x8x16xf32> to vector<1x8x16xf32>
    %367 = vector.shape_cast %366 : vector<1x8x16xf32> to vector<8x16xf32>
    %368 = vector.broadcast %365 : f32 to vector<8x16xf32>
    %369 = arith.mulf %368, %367 : vector<8x16xf32>
    %370 = arith.subf %364, %369 : vector<8x16xf32>
    %c58 = arith.constant 58 : index
    %371 = memref.load %arg2[%c58] : memref<144xf32, #tpu.memory_space<smem>>
    %372 = vector.extract_strided_slice %1 {offsets = [2, 0, 0], sizes = [1, 8, 16], strides = [1, 1, 1]} : vector<4x8x16xf32> to vector<1x8x16xf32>
    %373 = vector.shape_cast %372 : vector<1x8x16xf32> to vector<8x16xf32>
    %374 = vector.broadcast %371 : f32 to vector<8x16xf32>
    %375 = arith.mulf %374, %373 : vector<8x16xf32>
    %376 = arith.subf %370, %375 : vector<8x16xf32>
    %c67 = arith.constant 67 : index
    %377 = memref.load %arg2[%c67] : memref<144xf32, #tpu.memory_space<smem>>
    %378 = vector.extract_strided_slice %1 {offsets = [3, 0, 0], sizes = [1, 8, 16], strides = [1, 1, 1]} : vector<4x8x16xf32> to vector<1x8x16xf32>
    %379 = vector.shape_cast %378 : vector<1x8x16xf32> to vector<8x16xf32>
    %380 = vector.broadcast %377 : f32 to vector<8x16xf32>
    %381 = arith.mulf %380, %379 : vector<8x16xf32>
    %382 = arith.subf %376, %381 : vector<8x16xf32>
    %c41 = arith.constant 41 : index
    %383 = memref.load %arg2[%c41] : memref<144xf32, #tpu.memory_space<smem>>
    %384 = vector.extract_strided_slice %27 {offsets = [0, 0, 0], sizes = [1, 8, 16], strides = [1, 1, 1]} : vector<4x8x16xf32> to vector<1x8x16xf32>
    %385 = vector.shape_cast %384 : vector<1x8x16xf32> to vector<8x16xf32>
    %386 = vector.broadcast %383 : f32 to vector<8x16xf32>
    %387 = arith.mulf %386, %385 : vector<8x16xf32>
    %388 = arith.subf %382, %387 : vector<8x16xf32>
    %c50 = arith.constant 50 : index
    %389 = memref.load %arg2[%c50] : memref<144xf32, #tpu.memory_space<smem>>
    %390 = vector.extract_strided_slice %27 {offsets = [1, 0, 0], sizes = [1, 8, 16], strides = [1, 1, 1]} : vector<4x8x16xf32> to vector<1x8x16xf32>
    %391 = vector.shape_cast %390 : vector<1x8x16xf32> to vector<8x16xf32>
    %392 = vector.broadcast %389 : f32 to vector<8x16xf32>
    %393 = arith.mulf %392, %391 : vector<8x16xf32>
    %394 = arith.subf %388, %393 : vector<8x16xf32>
    %c59 = arith.constant 59 : index
    %395 = memref.load %arg2[%c59] : memref<144xf32, #tpu.memory_space<smem>>
    %396 = vector.extract_strided_slice %27 {offsets = [2, 0, 0], sizes = [1, 8, 16], strides = [1, 1, 1]} : vector<4x8x16xf32> to vector<1x8x16xf32>
    %397 = vector.shape_cast %396 : vector<1x8x16xf32> to vector<8x16xf32>
    %398 = vector.broadcast %395 : f32 to vector<8x16xf32>
    %399 = arith.mulf %398, %397 : vector<8x16xf32>
    %400 = arith.subf %394, %399 : vector<8x16xf32>
    %c68 = arith.constant 68 : index
    %401 = memref.load %arg2[%c68] : memref<144xf32, #tpu.memory_space<smem>>
    %402 = vector.extract_strided_slice %27 {offsets = [3, 0, 0], sizes = [1, 8, 16], strides = [1, 1, 1]} : vector<4x8x16xf32> to vector<1x8x16xf32>
    %403 = vector.shape_cast %402 : vector<1x8x16xf32> to vector<8x16xf32>
    %404 = vector.broadcast %401 : f32 to vector<8x16xf32>
    %405 = arith.mulf %404, %403 : vector<8x16xf32>
    %406 = arith.subf %400, %405 : vector<8x16xf32>
    %c42 = arith.constant 42 : index
    %407 = memref.load %arg2[%c42] : memref<144xf32, #tpu.memory_space<smem>>
    %408 = vector.extract_strided_slice %30 {offsets = [0, 0, 0], sizes = [1, 8, 16], strides = [1, 1, 1]} : vector<4x8x16xf32> to vector<1x8x16xf32>
    %409 = vector.shape_cast %408 : vector<1x8x16xf32> to vector<8x16xf32>
    %410 = vector.broadcast %407 : f32 to vector<8x16xf32>
    %411 = arith.mulf %410, %409 : vector<8x16xf32>
    %412 = arith.subf %406, %411 : vector<8x16xf32>
    %c51 = arith.constant 51 : index
    %413 = memref.load %arg2[%c51] : memref<144xf32, #tpu.memory_space<smem>>
    %414 = vector.extract_strided_slice %30 {offsets = [1, 0, 0], sizes = [1, 8, 16], strides = [1, 1, 1]} : vector<4x8x16xf32> to vector<1x8x16xf32>
    %415 = vector.shape_cast %414 : vector<1x8x16xf32> to vector<8x16xf32>
    %416 = vector.broadcast %413 : f32 to vector<8x16xf32>
    %417 = arith.mulf %416, %415 : vector<8x16xf32>
    %418 = arith.subf %412, %417 : vector<8x16xf32>
    %c60 = arith.constant 60 : index
    %419 = memref.load %arg2[%c60] : memref<144xf32, #tpu.memory_space<smem>>
    %420 = vector.extract_strided_slice %30 {offsets = [2, 0, 0], sizes = [1, 8, 16], strides = [1, 1, 1]} : vector<4x8x16xf32> to vector<1x8x16xf32>
    %421 = vector.shape_cast %420 : vector<1x8x16xf32> to vector<8x16xf32>
    %422 = vector.broadcast %419 : f32 to vector<8x16xf32>
    %423 = arith.mulf %422, %421 : vector<8x16xf32>
    %424 = arith.subf %418, %423 : vector<8x16xf32>
    %c69 = arith.constant 69 : index
    %425 = memref.load %arg2[%c69] : memref<144xf32, #tpu.memory_space<smem>>
    %426 = vector.extract_strided_slice %30 {offsets = [3, 0, 0], sizes = [1, 8, 16], strides = [1, 1, 1]} : vector<4x8x16xf32> to vector<1x8x16xf32>
    %427 = vector.shape_cast %426 : vector<1x8x16xf32> to vector<8x16xf32>
    %428 = vector.broadcast %425 : f32 to vector<8x16xf32>
    %429 = arith.mulf %428, %427 : vector<8x16xf32>
    %430 = arith.subf %424, %429 : vector<8x16xf32>
    %c43 = arith.constant 43 : index
    %431 = memref.load %arg2[%c43] : memref<144xf32, #tpu.memory_space<smem>>
    %432 = vector.extract_strided_slice %15 {offsets = [0, 0, 0], sizes = [1, 8, 16], strides = [1, 1, 1]} : vector<4x8x16xf32> to vector<1x8x16xf32>
    %433 = vector.shape_cast %432 : vector<1x8x16xf32> to vector<8x16xf32>
    %434 = vector.broadcast %431 : f32 to vector<8x16xf32>
    %435 = arith.mulf %434, %433 : vector<8x16xf32>
    %436 = arith.subf %430, %435 : vector<8x16xf32>
    %c52 = arith.constant 52 : index
    %437 = memref.load %arg2[%c52] : memref<144xf32, #tpu.memory_space<smem>>
    %438 = vector.extract_strided_slice %15 {offsets = [1, 0, 0], sizes = [1, 8, 16], strides = [1, 1, 1]} : vector<4x8x16xf32> to vector<1x8x16xf32>
    %439 = vector.shape_cast %438 : vector<1x8x16xf32> to vector<8x16xf32>
    %440 = vector.broadcast %437 : f32 to vector<8x16xf32>
    %441 = arith.mulf %440, %439 : vector<8x16xf32>
    %442 = arith.subf %436, %441 : vector<8x16xf32>
    %c61 = arith.constant 61 : index
    %443 = memref.load %arg2[%c61] : memref<144xf32, #tpu.memory_space<smem>>
    %444 = vector.extract_strided_slice %15 {offsets = [2, 0, 0], sizes = [1, 8, 16], strides = [1, 1, 1]} : vector<4x8x16xf32> to vector<1x8x16xf32>
    %445 = vector.shape_cast %444 : vector<1x8x16xf32> to vector<8x16xf32>
    %446 = vector.broadcast %443 : f32 to vector<8x16xf32>
    %447 = arith.mulf %446, %445 : vector<8x16xf32>
    %448 = arith.subf %442, %447 : vector<8x16xf32>
    %c70 = arith.constant 70 : index
    %449 = memref.load %arg2[%c70] : memref<144xf32, #tpu.memory_space<smem>>
    %450 = vector.extract_strided_slice %15 {offsets = [3, 0, 0], sizes = [1, 8, 16], strides = [1, 1, 1]} : vector<4x8x16xf32> to vector<1x8x16xf32>
    %451 = vector.shape_cast %450 : vector<1x8x16xf32> to vector<8x16xf32>
    %452 = vector.broadcast %449 : f32 to vector<8x16xf32>
    %453 = arith.mulf %452, %451 : vector<8x16xf32>
    %454 = arith.subf %448, %453 : vector<8x16xf32>
    %c44 = arith.constant 44 : index
    %455 = memref.load %arg2[%c44] : memref<144xf32, #tpu.memory_space<smem>>
    %456 = vector.extract_strided_slice %33 {offsets = [0, 0, 0], sizes = [1, 8, 16], strides = [1, 1, 1]} : vector<4x8x16xf32> to vector<1x8x16xf32>
    %457 = vector.shape_cast %456 : vector<1x8x16xf32> to vector<8x16xf32>
    %458 = vector.broadcast %455 : f32 to vector<8x16xf32>
    %459 = arith.mulf %458, %457 : vector<8x16xf32>
    %460 = arith.subf %454, %459 : vector<8x16xf32>
    %c53 = arith.constant 53 : index
    %461 = memref.load %arg2[%c53] : memref<144xf32, #tpu.memory_space<smem>>
    %462 = vector.extract_strided_slice %33 {offsets = [1, 0, 0], sizes = [1, 8, 16], strides = [1, 1, 1]} : vector<4x8x16xf32> to vector<1x8x16xf32>
    %463 = vector.shape_cast %462 : vector<1x8x16xf32> to vector<8x16xf32>
    %464 = vector.broadcast %461 : f32 to vector<8x16xf32>
    %465 = arith.mulf %464, %463 : vector<8x16xf32>
    %466 = arith.subf %460, %465 : vector<8x16xf32>
    %c62 = arith.constant 62 : index
    %467 = memref.load %arg2[%c62] : memref<144xf32, #tpu.memory_space<smem>>
    %468 = vector.extract_strided_slice %33 {offsets = [2, 0, 0], sizes = [1, 8, 16], strides = [1, 1, 1]} : vector<4x8x16xf32> to vector<1x8x16xf32>
    %469 = vector.shape_cast %468 : vector<1x8x16xf32> to vector<8x16xf32>
    %470 = vector.broadcast %467 : f32 to vector<8x16xf32>
    %471 = arith.mulf %470, %469 : vector<8x16xf32>
    %472 = arith.subf %466, %471 : vector<8x16xf32>
    %c71 = arith.constant 71 : index
    %473 = memref.load %arg2[%c71] : memref<144xf32, #tpu.memory_space<smem>>
    %474 = vector.extract_strided_slice %33 {offsets = [3, 0, 0], sizes = [1, 8, 16], strides = [1, 1, 1]} : vector<4x8x16xf32> to vector<1x8x16xf32>
    %475 = vector.shape_cast %474 : vector<1x8x16xf32> to vector<8x16xf32>
    %476 = vector.broadcast %473 : f32 to vector<8x16xf32>
    %477 = arith.mulf %476, %475 : vector<8x16xf32>
    %478 = arith.subf %472, %477 : vector<8x16xf32>
    %479 = arith.mulf %259, %478 : vector<8x16xf32>
    %480 = arith.addf %257, %479 : vector<8x16xf32>
    %481 = vector.extract_strided_slice %1 {offsets = [2, 0, 0], sizes = [1, 8, 16], strides = [1, 1, 1]} : vector<4x8x16xf32> to vector<1x8x16xf32>
    %482 = vector.shape_cast %481 : vector<1x8x16xf32> to vector<8x16xf32>
    %c2_22 = arith.constant 2 : index
    %483 = memref.load %arg3[%c2_22] : memref<4xf32, #tpu.memory_space<smem>>
    %484 = vector.broadcast %483 : f32 to vector<8x16xf32>
    %485 = arith.subf %482, %484 : vector<8x16xf32>
    %c72 = arith.constant 72 : index
    %486 = memref.load %arg2[%c72] : memref<144xf32, #tpu.memory_space<smem>>
    %487 = vector.extract_strided_slice %18 {offsets = [0, 0, 0], sizes = [1, 8, 16], strides = [1, 1, 1]} : vector<4x8x16xf32> to vector<1x8x16xf32>
    %488 = vector.shape_cast %487 : vector<1x8x16xf32> to vector<8x16xf32>
    %489 = vector.broadcast %486 : f32 to vector<8x16xf32>
    %490 = arith.mulf %489, %488 : vector<8x16xf32>
    %491 = arith.subf %485, %490 : vector<8x16xf32>
    %c81 = arith.constant 81 : index
    %492 = memref.load %arg2[%c81] : memref<144xf32, #tpu.memory_space<smem>>
    %493 = vector.extract_strided_slice %18 {offsets = [1, 0, 0], sizes = [1, 8, 16], strides = [1, 1, 1]} : vector<4x8x16xf32> to vector<1x8x16xf32>
    %494 = vector.shape_cast %493 : vector<1x8x16xf32> to vector<8x16xf32>
    %495 = vector.broadcast %492 : f32 to vector<8x16xf32>
    %496 = arith.mulf %495, %494 : vector<8x16xf32>
    %497 = arith.subf %491, %496 : vector<8x16xf32>
    %c90 = arith.constant 90 : index
    %498 = memref.load %arg2[%c90] : memref<144xf32, #tpu.memory_space<smem>>
    %499 = vector.extract_strided_slice %18 {offsets = [2, 0, 0], sizes = [1, 8, 16], strides = [1, 1, 1]} : vector<4x8x16xf32> to vector<1x8x16xf32>
    %500 = vector.shape_cast %499 : vector<1x8x16xf32> to vector<8x16xf32>
    %501 = vector.broadcast %498 : f32 to vector<8x16xf32>
    %502 = arith.mulf %501, %500 : vector<8x16xf32>
    %503 = arith.subf %497, %502 : vector<8x16xf32>
    %c99 = arith.constant 99 : index
    %504 = memref.load %arg2[%c99] : memref<144xf32, #tpu.memory_space<smem>>
    %505 = vector.extract_strided_slice %18 {offsets = [3, 0, 0], sizes = [1, 8, 16], strides = [1, 1, 1]} : vector<4x8x16xf32> to vector<1x8x16xf32>
    %506 = vector.shape_cast %505 : vector<1x8x16xf32> to vector<8x16xf32>
    %507 = vector.broadcast %504 : f32 to vector<8x16xf32>
    %508 = arith.mulf %507, %506 : vector<8x16xf32>
    %509 = arith.subf %503, %508 : vector<8x16xf32>
    %c73 = arith.constant 73 : index
    %510 = memref.load %arg2[%c73] : memref<144xf32, #tpu.memory_space<smem>>
    %511 = vector.extract_strided_slice %13 {offsets = [0, 0, 0], sizes = [1, 8, 16], strides = [1, 1, 1]} : vector<4x8x16xf32> to vector<1x8x16xf32>
    %512 = vector.shape_cast %511 : vector<1x8x16xf32> to vector<8x16xf32>
    %513 = vector.broadcast %510 : f32 to vector<8x16xf32>
    %514 = arith.mulf %513, %512 : vector<8x16xf32>
    %515 = arith.subf %509, %514 : vector<8x16xf32>
    %c82 = arith.constant 82 : index
    %516 = memref.load %arg2[%c82] : memref<144xf32, #tpu.memory_space<smem>>
    %517 = vector.extract_strided_slice %13 {offsets = [1, 0, 0], sizes = [1, 8, 16], strides = [1, 1, 1]} : vector<4x8x16xf32> to vector<1x8x16xf32>
    %518 = vector.shape_cast %517 : vector<1x8x16xf32> to vector<8x16xf32>
    %519 = vector.broadcast %516 : f32 to vector<8x16xf32>
    %520 = arith.mulf %519, %518 : vector<8x16xf32>
    %521 = arith.subf %515, %520 : vector<8x16xf32>
    %c91 = arith.constant 91 : index
    %522 = memref.load %arg2[%c91] : memref<144xf32, #tpu.memory_space<smem>>
    %523 = vector.extract_strided_slice %13 {offsets = [2, 0, 0], sizes = [1, 8, 16], strides = [1, 1, 1]} : vector<4x8x16xf32> to vector<1x8x16xf32>
    %524 = vector.shape_cast %523 : vector<1x8x16xf32> to vector<8x16xf32>
    %525 = vector.broadcast %522 : f32 to vector<8x16xf32>
    %526 = arith.mulf %525, %524 : vector<8x16xf32>
    %527 = arith.subf %521, %526 : vector<8x16xf32>
    %c100 = arith.constant 100 : index
    %528 = memref.load %arg2[%c100] : memref<144xf32, #tpu.memory_space<smem>>
    %529 = vector.extract_strided_slice %13 {offsets = [3, 0, 0], sizes = [1, 8, 16], strides = [1, 1, 1]} : vector<4x8x16xf32> to vector<1x8x16xf32>
    %530 = vector.shape_cast %529 : vector<1x8x16xf32> to vector<8x16xf32>
    %531 = vector.broadcast %528 : f32 to vector<8x16xf32>
    %532 = arith.mulf %531, %530 : vector<8x16xf32>
    %533 = arith.subf %527, %532 : vector<8x16xf32>
    %c74 = arith.constant 74 : index
    %534 = memref.load %arg2[%c74] : memref<144xf32, #tpu.memory_space<smem>>
    %535 = vector.extract_strided_slice %21 {offsets = [0, 0, 0], sizes = [1, 8, 16], strides = [1, 1, 1]} : vector<4x8x16xf32> to vector<1x8x16xf32>
    %536 = vector.shape_cast %535 : vector<1x8x16xf32> to vector<8x16xf32>
    %537 = vector.broadcast %534 : f32 to vector<8x16xf32>
    %538 = arith.mulf %537, %536 : vector<8x16xf32>
    %539 = arith.subf %533, %538 : vector<8x16xf32>
    %c83 = arith.constant 83 : index
    %540 = memref.load %arg2[%c83] : memref<144xf32, #tpu.memory_space<smem>>
    %541 = vector.extract_strided_slice %21 {offsets = [1, 0, 0], sizes = [1, 8, 16], strides = [1, 1, 1]} : vector<4x8x16xf32> to vector<1x8x16xf32>
    %542 = vector.shape_cast %541 : vector<1x8x16xf32> to vector<8x16xf32>
    %543 = vector.broadcast %540 : f32 to vector<8x16xf32>
    %544 = arith.mulf %543, %542 : vector<8x16xf32>
    %545 = arith.subf %539, %544 : vector<8x16xf32>
    %c92 = arith.constant 92 : index
    %546 = memref.load %arg2[%c92] : memref<144xf32, #tpu.memory_space<smem>>
    %547 = vector.extract_strided_slice %21 {offsets = [2, 0, 0], sizes = [1, 8, 16], strides = [1, 1, 1]} : vector<4x8x16xf32> to vector<1x8x16xf32>
    %548 = vector.shape_cast %547 : vector<1x8x16xf32> to vector<8x16xf32>
    %549 = vector.broadcast %546 : f32 to vector<8x16xf32>
    %550 = arith.mulf %549, %548 : vector<8x16xf32>
    %551 = arith.subf %545, %550 : vector<8x16xf32>
    %c101 = arith.constant 101 : index
    %552 = memref.load %arg2[%c101] : memref<144xf32, #tpu.memory_space<smem>>
    %553 = vector.extract_strided_slice %21 {offsets = [3, 0, 0], sizes = [1, 8, 16], strides = [1, 1, 1]} : vector<4x8x16xf32> to vector<1x8x16xf32>
    %554 = vector.shape_cast %553 : vector<1x8x16xf32> to vector<8x16xf32>
    %555 = vector.broadcast %552 : f32 to vector<8x16xf32>
    %556 = arith.mulf %555, %554 : vector<8x16xf32>
    %557 = arith.subf %551, %556 : vector<8x16xf32>
    %c75 = arith.constant 75 : index
    %558 = memref.load %arg2[%c75] : memref<144xf32, #tpu.memory_space<smem>>
    %559 = vector.extract_strided_slice %24 {offsets = [0, 0, 0], sizes = [1, 8, 16], strides = [1, 1, 1]} : vector<4x8x16xf32> to vector<1x8x16xf32>
    %560 = vector.shape_cast %559 : vector<1x8x16xf32> to vector<8x16xf32>
    %561 = vector.broadcast %558 : f32 to vector<8x16xf32>
    %562 = arith.mulf %561, %560 : vector<8x16xf32>
    %563 = arith.subf %557, %562 : vector<8x16xf32>
    %c84 = arith.constant 84 : index
    %564 = memref.load %arg2[%c84] : memref<144xf32, #tpu.memory_space<smem>>
    %565 = vector.extract_strided_slice %24 {offsets = [1, 0, 0], sizes = [1, 8, 16], strides = [1, 1, 1]} : vector<4x8x16xf32> to vector<1x8x16xf32>
    %566 = vector.shape_cast %565 : vector<1x8x16xf32> to vector<8x16xf32>
    %567 = vector.broadcast %564 : f32 to vector<8x16xf32>
    %568 = arith.mulf %567, %566 : vector<8x16xf32>
    %569 = arith.subf %563, %568 : vector<8x16xf32>
    %c93 = arith.constant 93 : index
    %570 = memref.load %arg2[%c93] : memref<144xf32, #tpu.memory_space<smem>>
    %571 = vector.extract_strided_slice %24 {offsets = [2, 0, 0], sizes = [1, 8, 16], strides = [1, 1, 1]} : vector<4x8x16xf32> to vector<1x8x16xf32>
    %572 = vector.shape_cast %571 : vector<1x8x16xf32> to vector<8x16xf32>
    %573 = vector.broadcast %570 : f32 to vector<8x16xf32>
    %574 = arith.mulf %573, %572 : vector<8x16xf32>
    %575 = arith.subf %569, %574 : vector<8x16xf32>
    %c102 = arith.constant 102 : index
    %576 = memref.load %arg2[%c102] : memref<144xf32, #tpu.memory_space<smem>>
    %577 = vector.extract_strided_slice %24 {offsets = [3, 0, 0], sizes = [1, 8, 16], strides = [1, 1, 1]} : vector<4x8x16xf32> to vector<1x8x16xf32>
    %578 = vector.shape_cast %577 : vector<1x8x16xf32> to vector<8x16xf32>
    %579 = vector.broadcast %576 : f32 to vector<8x16xf32>
    %580 = arith.mulf %579, %578 : vector<8x16xf32>
    %581 = arith.subf %575, %580 : vector<8x16xf32>
    %c76 = arith.constant 76 : index
    %582 = memref.load %arg2[%c76] : memref<144xf32, #tpu.memory_space<smem>>
    %583 = vector.extract_strided_slice %1 {offsets = [0, 0, 0], sizes = [1, 8, 16], strides = [1, 1, 1]} : vector<4x8x16xf32> to vector<1x8x16xf32>
    %584 = vector.shape_cast %583 : vector<1x8x16xf32> to vector<8x16xf32>
    %585 = vector.broadcast %582 : f32 to vector<8x16xf32>
    %586 = arith.mulf %585, %584 : vector<8x16xf32>
    %587 = arith.subf %581, %586 : vector<8x16xf32>
    %c85 = arith.constant 85 : index
    %588 = memref.load %arg2[%c85] : memref<144xf32, #tpu.memory_space<smem>>
    %589 = vector.extract_strided_slice %1 {offsets = [1, 0, 0], sizes = [1, 8, 16], strides = [1, 1, 1]} : vector<4x8x16xf32> to vector<1x8x16xf32>
    %590 = vector.shape_cast %589 : vector<1x8x16xf32> to vector<8x16xf32>
    %591 = vector.broadcast %588 : f32 to vector<8x16xf32>
    %592 = arith.mulf %591, %590 : vector<8x16xf32>
    %593 = arith.subf %587, %592 : vector<8x16xf32>
    %c94 = arith.constant 94 : index
    %594 = memref.load %arg2[%c94] : memref<144xf32, #tpu.memory_space<smem>>
    %595 = vector.extract_strided_slice %1 {offsets = [2, 0, 0], sizes = [1, 8, 16], strides = [1, 1, 1]} : vector<4x8x16xf32> to vector<1x8x16xf32>
    %596 = vector.shape_cast %595 : vector<1x8x16xf32> to vector<8x16xf32>
    %597 = vector.broadcast %594 : f32 to vector<8x16xf32>
    %598 = arith.mulf %597, %596 : vector<8x16xf32>
    %599 = arith.subf %593, %598 : vector<8x16xf32>
    %c103 = arith.constant 103 : index
    %600 = memref.load %arg2[%c103] : memref<144xf32, #tpu.memory_space<smem>>
    %601 = vector.extract_strided_slice %1 {offsets = [3, 0, 0], sizes = [1, 8, 16], strides = [1, 1, 1]} : vector<4x8x16xf32> to vector<1x8x16xf32>
    %602 = vector.shape_cast %601 : vector<1x8x16xf32> to vector<8x16xf32>
    %603 = vector.broadcast %600 : f32 to vector<8x16xf32>
    %604 = arith.mulf %603, %602 : vector<8x16xf32>
    %605 = arith.subf %599, %604 : vector<8x16xf32>
    %c77 = arith.constant 77 : index
    %606 = memref.load %arg2[%c77] : memref<144xf32, #tpu.memory_space<smem>>
    %607 = vector.extract_strided_slice %27 {offsets = [0, 0, 0], sizes = [1, 8, 16], strides = [1, 1, 1]} : vector<4x8x16xf32> to vector<1x8x16xf32>
    %608 = vector.shape_cast %607 : vector<1x8x16xf32> to vector<8x16xf32>
    %609 = vector.broadcast %606 : f32 to vector<8x16xf32>
    %610 = arith.mulf %609, %608 : vector<8x16xf32>
    %611 = arith.subf %605, %610 : vector<8x16xf32>
    %c86 = arith.constant 86 : index
    %612 = memref.load %arg2[%c86] : memref<144xf32, #tpu.memory_space<smem>>
    %613 = vector.extract_strided_slice %27 {offsets = [1, 0, 0], sizes = [1, 8, 16], strides = [1, 1, 1]} : vector<4x8x16xf32> to vector<1x8x16xf32>
    %614 = vector.shape_cast %613 : vector<1x8x16xf32> to vector<8x16xf32>
    %615 = vector.broadcast %612 : f32 to vector<8x16xf32>
    %616 = arith.mulf %615, %614 : vector<8x16xf32>
    %617 = arith.subf %611, %616 : vector<8x16xf32>
    %c95 = arith.constant 95 : index
    %618 = memref.load %arg2[%c95] : memref<144xf32, #tpu.memory_space<smem>>
    %619 = vector.extract_strided_slice %27 {offsets = [2, 0, 0], sizes = [1, 8, 16], strides = [1, 1, 1]} : vector<4x8x16xf32> to vector<1x8x16xf32>
    %620 = vector.shape_cast %619 : vector<1x8x16xf32> to vector<8x16xf32>
    %621 = vector.broadcast %618 : f32 to vector<8x16xf32>
    %622 = arith.mulf %621, %620 : vector<8x16xf32>
    %623 = arith.subf %617, %622 : vector<8x16xf32>
    %c104 = arith.constant 104 : index
    %624 = memref.load %arg2[%c104] : memref<144xf32, #tpu.memory_space<smem>>
    %625 = vector.extract_strided_slice %27 {offsets = [3, 0, 0], sizes = [1, 8, 16], strides = [1, 1, 1]} : vector<4x8x16xf32> to vector<1x8x16xf32>
    %626 = vector.shape_cast %625 : vector<1x8x16xf32> to vector<8x16xf32>
    %627 = vector.broadcast %624 : f32 to vector<8x16xf32>
    %628 = arith.mulf %627, %626 : vector<8x16xf32>
    %629 = arith.subf %623, %628 : vector<8x16xf32>
    %c78 = arith.constant 78 : index
    %630 = memref.load %arg2[%c78] : memref<144xf32, #tpu.memory_space<smem>>
    %631 = vector.extract_strided_slice %30 {offsets = [0, 0, 0], sizes = [1, 8, 16], strides = [1, 1, 1]} : vector<4x8x16xf32> to vector<1x8x16xf32>
    %632 = vector.shape_cast %631 : vector<1x8x16xf32> to vector<8x16xf32>
    %633 = vector.broadcast %630 : f32 to vector<8x16xf32>
    %634 = arith.mulf %633, %632 : vector<8x16xf32>
    %635 = arith.subf %629, %634 : vector<8x16xf32>
    %c87 = arith.constant 87 : index
    %636 = memref.load %arg2[%c87] : memref<144xf32, #tpu.memory_space<smem>>
    %637 = vector.extract_strided_slice %30 {offsets = [1, 0, 0], sizes = [1, 8, 16], strides = [1, 1, 1]} : vector<4x8x16xf32> to vector<1x8x16xf32>
    %638 = vector.shape_cast %637 : vector<1x8x16xf32> to vector<8x16xf32>
    %639 = vector.broadcast %636 : f32 to vector<8x16xf32>
    %640 = arith.mulf %639, %638 : vector<8x16xf32>
    %641 = arith.subf %635, %640 : vector<8x16xf32>
    %c96 = arith.constant 96 : index
    %642 = memref.load %arg2[%c96] : memref<144xf32, #tpu.memory_space<smem>>
    %643 = vector.extract_strided_slice %30 {offsets = [2, 0, 0], sizes = [1, 8, 16], strides = [1, 1, 1]} : vector<4x8x16xf32> to vector<1x8x16xf32>
    %644 = vector.shape_cast %643 : vector<1x8x16xf32> to vector<8x16xf32>
    %645 = vector.broadcast %642 : f32 to vector<8x16xf32>
    %646 = arith.mulf %645, %644 : vector<8x16xf32>
    %647 = arith.subf %641, %646 : vector<8x16xf32>
    %c105 = arith.constant 105 : index
    %648 = memref.load %arg2[%c105] : memref<144xf32, #tpu.memory_space<smem>>
    %649 = vector.extract_strided_slice %30 {offsets = [3, 0, 0], sizes = [1, 8, 16], strides = [1, 1, 1]} : vector<4x8x16xf32> to vector<1x8x16xf32>
    %650 = vector.shape_cast %649 : vector<1x8x16xf32> to vector<8x16xf32>
    %651 = vector.broadcast %648 : f32 to vector<8x16xf32>
    %652 = arith.mulf %651, %650 : vector<8x16xf32>
    %653 = arith.subf %647, %652 : vector<8x16xf32>
    %c79 = arith.constant 79 : index
    %654 = memref.load %arg2[%c79] : memref<144xf32, #tpu.memory_space<smem>>
    %655 = vector.extract_strided_slice %15 {offsets = [0, 0, 0], sizes = [1, 8, 16], strides = [1, 1, 1]} : vector<4x8x16xf32> to vector<1x8x16xf32>
    %656 = vector.shape_cast %655 : vector<1x8x16xf32> to vector<8x16xf32>
    %657 = vector.broadcast %654 : f32 to vector<8x16xf32>
    %658 = arith.mulf %657, %656 : vector<8x16xf32>
    %659 = arith.subf %653, %658 : vector<8x16xf32>
    %c88 = arith.constant 88 : index
    %660 = memref.load %arg2[%c88] : memref<144xf32, #tpu.memory_space<smem>>
    %661 = vector.extract_strided_slice %15 {offsets = [1, 0, 0], sizes = [1, 8, 16], strides = [1, 1, 1]} : vector<4x8x16xf32> to vector<1x8x16xf32>
    %662 = vector.shape_cast %661 : vector<1x8x16xf32> to vector<8x16xf32>
    %663 = vector.broadcast %660 : f32 to vector<8x16xf32>
    %664 = arith.mulf %663, %662 : vector<8x16xf32>
    %665 = arith.subf %659, %664 : vector<8x16xf32>
    %c97 = arith.constant 97 : index
    %666 = memref.load %arg2[%c97] : memref<144xf32, #tpu.memory_space<smem>>
    %667 = vector.extract_strided_slice %15 {offsets = [2, 0, 0], sizes = [1, 8, 16], strides = [1, 1, 1]} : vector<4x8x16xf32> to vector<1x8x16xf32>
    %668 = vector.shape_cast %667 : vector<1x8x16xf32> to vector<8x16xf32>
    %669 = vector.broadcast %666 : f32 to vector<8x16xf32>
    %670 = arith.mulf %669, %668 : vector<8x16xf32>
    %671 = arith.subf %665, %670 : vector<8x16xf32>
    %c106 = arith.constant 106 : index
    %672 = memref.load %arg2[%c106] : memref<144xf32, #tpu.memory_space<smem>>
    %673 = vector.extract_strided_slice %15 {offsets = [3, 0, 0], sizes = [1, 8, 16], strides = [1, 1, 1]} : vector<4x8x16xf32> to vector<1x8x16xf32>
    %674 = vector.shape_cast %673 : vector<1x8x16xf32> to vector<8x16xf32>
    %675 = vector.broadcast %672 : f32 to vector<8x16xf32>
    %676 = arith.mulf %675, %674 : vector<8x16xf32>
    %677 = arith.subf %671, %676 : vector<8x16xf32>
    %c80 = arith.constant 80 : index
    %678 = memref.load %arg2[%c80] : memref<144xf32, #tpu.memory_space<smem>>
    %679 = vector.extract_strided_slice %33 {offsets = [0, 0, 0], sizes = [1, 8, 16], strides = [1, 1, 1]} : vector<4x8x16xf32> to vector<1x8x16xf32>
    %680 = vector.shape_cast %679 : vector<1x8x16xf32> to vector<8x16xf32>
    %681 = vector.broadcast %678 : f32 to vector<8x16xf32>
    %682 = arith.mulf %681, %680 : vector<8x16xf32>
    %683 = arith.subf %677, %682 : vector<8x16xf32>
    %c89 = arith.constant 89 : index
    %684 = memref.load %arg2[%c89] : memref<144xf32, #tpu.memory_space<smem>>
    %685 = vector.extract_strided_slice %33 {offsets = [1, 0, 0], sizes = [1, 8, 16], strides = [1, 1, 1]} : vector<4x8x16xf32> to vector<1x8x16xf32>
    %686 = vector.shape_cast %685 : vector<1x8x16xf32> to vector<8x16xf32>
    %687 = vector.broadcast %684 : f32 to vector<8x16xf32>
    %688 = arith.mulf %687, %686 : vector<8x16xf32>
    %689 = arith.subf %683, %688 : vector<8x16xf32>
    %c98 = arith.constant 98 : index
    %690 = memref.load %arg2[%c98] : memref<144xf32, #tpu.memory_space<smem>>
    %691 = vector.extract_strided_slice %33 {offsets = [2, 0, 0], sizes = [1, 8, 16], strides = [1, 1, 1]} : vector<4x8x16xf32> to vector<1x8x16xf32>
    %692 = vector.shape_cast %691 : vector<1x8x16xf32> to vector<8x16xf32>
    %693 = vector.broadcast %690 : f32 to vector<8x16xf32>
    %694 = arith.mulf %693, %692 : vector<8x16xf32>
    %695 = arith.subf %689, %694 : vector<8x16xf32>
    %c107 = arith.constant 107 : index
    %696 = memref.load %arg2[%c107] : memref<144xf32, #tpu.memory_space<smem>>
    %697 = vector.extract_strided_slice %33 {offsets = [3, 0, 0], sizes = [1, 8, 16], strides = [1, 1, 1]} : vector<4x8x16xf32> to vector<1x8x16xf32>
    %698 = vector.shape_cast %697 : vector<1x8x16xf32> to vector<8x16xf32>
    %699 = vector.broadcast %696 : f32 to vector<8x16xf32>
    %700 = arith.mulf %699, %698 : vector<8x16xf32>
    %701 = arith.subf %695, %700 : vector<8x16xf32>
    %702 = arith.mulf %482, %701 : vector<8x16xf32>
    %703 = arith.addf %480, %702 : vector<8x16xf32>
    %704 = vector.extract_strided_slice %1 {offsets = [3, 0, 0], sizes = [1, 8, 16], strides = [1, 1, 1]} : vector<4x8x16xf32> to vector<1x8x16xf32>
    %705 = vector.shape_cast %704 : vector<1x8x16xf32> to vector<8x16xf32>
    %c3_23 = arith.constant 3 : index
    %706 = memref.load %arg3[%c3_23] : memref<4xf32, #tpu.memory_space<smem>>
    %707 = vector.broadcast %706 : f32 to vector<8x16xf32>
    %708 = arith.subf %705, %707 : vector<8x16xf32>
    %c108 = arith.constant 108 : index
    %709 = memref.load %arg2[%c108] : memref<144xf32, #tpu.memory_space<smem>>
    %710 = vector.extract_strided_slice %18 {offsets = [0, 0, 0], sizes = [1, 8, 16], strides = [1, 1, 1]} : vector<4x8x16xf32> to vector<1x8x16xf32>
    %711 = vector.shape_cast %710 : vector<1x8x16xf32> to vector<8x16xf32>
    %712 = vector.broadcast %709 : f32 to vector<8x16xf32>
    %713 = arith.mulf %712, %711 : vector<8x16xf32>
    %714 = arith.subf %708, %713 : vector<8x16xf32>
    %c117 = arith.constant 117 : index
    %715 = memref.load %arg2[%c117] : memref<144xf32, #tpu.memory_space<smem>>
    %716 = vector.extract_strided_slice %18 {offsets = [1, 0, 0], sizes = [1, 8, 16], strides = [1, 1, 1]} : vector<4x8x16xf32> to vector<1x8x16xf32>
    %717 = vector.shape_cast %716 : vector<1x8x16xf32> to vector<8x16xf32>
    %718 = vector.broadcast %715 : f32 to vector<8x16xf32>
    %719 = arith.mulf %718, %717 : vector<8x16xf32>
    %720 = arith.subf %714, %719 : vector<8x16xf32>
    %c126 = arith.constant 126 : index
    %721 = memref.load %arg2[%c126] : memref<144xf32, #tpu.memory_space<smem>>
    %722 = vector.extract_strided_slice %18 {offsets = [2, 0, 0], sizes = [1, 8, 16], strides = [1, 1, 1]} : vector<4x8x16xf32> to vector<1x8x16xf32>
    %723 = vector.shape_cast %722 : vector<1x8x16xf32> to vector<8x16xf32>
    %724 = vector.broadcast %721 : f32 to vector<8x16xf32>
    %725 = arith.mulf %724, %723 : vector<8x16xf32>
    %726 = arith.subf %720, %725 : vector<8x16xf32>
    %c135 = arith.constant 135 : index
    %727 = memref.load %arg2[%c135] : memref<144xf32, #tpu.memory_space<smem>>
    %728 = vector.extract_strided_slice %18 {offsets = [3, 0, 0], sizes = [1, 8, 16], strides = [1, 1, 1]} : vector<4x8x16xf32> to vector<1x8x16xf32>
    %729 = vector.shape_cast %728 : vector<1x8x16xf32> to vector<8x16xf32>
    %730 = vector.broadcast %727 : f32 to vector<8x16xf32>
    %731 = arith.mulf %730, %729 : vector<8x16xf32>
    %732 = arith.subf %726, %731 : vector<8x16xf32>
    %c109 = arith.constant 109 : index
    %733 = memref.load %arg2[%c109] : memref<144xf32, #tpu.memory_space<smem>>
    %734 = vector.extract_strided_slice %13 {offsets = [0, 0, 0], sizes = [1, 8, 16], strides = [1, 1, 1]} : vector<4x8x16xf32> to vector<1x8x16xf32>
    %735 = vector.shape_cast %734 : vector<1x8x16xf32> to vector<8x16xf32>
    %736 = vector.broadcast %733 : f32 to vector<8x16xf32>
    %737 = arith.mulf %736, %735 : vector<8x16xf32>
    %738 = arith.subf %732, %737 : vector<8x16xf32>
    %c118 = arith.constant 118 : index
    %739 = memref.load %arg2[%c118] : memref<144xf32, #tpu.memory_space<smem>>
    %740 = vector.extract_strided_slice %13 {offsets = [1, 0, 0], sizes = [1, 8, 16], strides = [1, 1, 1]} : vector<4x8x16xf32> to vector<1x8x16xf32>
    %741 = vector.shape_cast %740 : vector<1x8x16xf32> to vector<8x16xf32>
    %742 = vector.broadcast %739 : f32 to vector<8x16xf32>
    %743 = arith.mulf %742, %741 : vector<8x16xf32>
    %744 = arith.subf %738, %743 : vector<8x16xf32>
    %c127 = arith.constant 127 : index
    %745 = memref.load %arg2[%c127] : memref<144xf32, #tpu.memory_space<smem>>
    %746 = vector.extract_strided_slice %13 {offsets = [2, 0, 0], sizes = [1, 8, 16], strides = [1, 1, 1]} : vector<4x8x16xf32> to vector<1x8x16xf32>
    %747 = vector.shape_cast %746 : vector<1x8x16xf32> to vector<8x16xf32>
    %748 = vector.broadcast %745 : f32 to vector<8x16xf32>
    %749 = arith.mulf %748, %747 : vector<8x16xf32>
    %750 = arith.subf %744, %749 : vector<8x16xf32>
    %c136 = arith.constant 136 : index
    %751 = memref.load %arg2[%c136] : memref<144xf32, #tpu.memory_space<smem>>
    %752 = vector.extract_strided_slice %13 {offsets = [3, 0, 0], sizes = [1, 8, 16], strides = [1, 1, 1]} : vector<4x8x16xf32> to vector<1x8x16xf32>
    %753 = vector.shape_cast %752 : vector<1x8x16xf32> to vector<8x16xf32>
    %754 = vector.broadcast %751 : f32 to vector<8x16xf32>
    %755 = arith.mulf %754, %753 : vector<8x16xf32>
    %756 = arith.subf %750, %755 : vector<8x16xf32>
    %c110 = arith.constant 110 : index
    %757 = memref.load %arg2[%c110] : memref<144xf32, #tpu.memory_space<smem>>
    %758 = vector.extract_strided_slice %21 {offsets = [0, 0, 0], sizes = [1, 8, 16], strides = [1, 1, 1]} : vector<4x8x16xf32> to vector<1x8x16xf32>
    %759 = vector.shape_cast %758 : vector<1x8x16xf32> to vector<8x16xf32>
    %760 = vector.broadcast %757 : f32 to vector<8x16xf32>
    %761 = arith.mulf %760, %759 : vector<8x16xf32>
    %762 = arith.subf %756, %761 : vector<8x16xf32>
    %c119 = arith.constant 119 : index
    %763 = memref.load %arg2[%c119] : memref<144xf32, #tpu.memory_space<smem>>
    %764 = vector.extract_strided_slice %21 {offsets = [1, 0, 0], sizes = [1, 8, 16], strides = [1, 1, 1]} : vector<4x8x16xf32> to vector<1x8x16xf32>
    %765 = vector.shape_cast %764 : vector<1x8x16xf32> to vector<8x16xf32>
    %766 = vector.broadcast %763 : f32 to vector<8x16xf32>
    %767 = arith.mulf %766, %765 : vector<8x16xf32>
    %768 = arith.subf %762, %767 : vector<8x16xf32>
    %c128 = arith.constant 128 : index
    %769 = memref.load %arg2[%c128] : memref<144xf32, #tpu.memory_space<smem>>
    %770 = vector.extract_strided_slice %21 {offsets = [2, 0, 0], sizes = [1, 8, 16], strides = [1, 1, 1]} : vector<4x8x16xf32> to vector<1x8x16xf32>
    %771 = vector.shape_cast %770 : vector<1x8x16xf32> to vector<8x16xf32>
    %772 = vector.broadcast %769 : f32 to vector<8x16xf32>
    %773 = arith.mulf %772, %771 : vector<8x16xf32>
    %774 = arith.subf %768, %773 : vector<8x16xf32>
    %c137 = arith.constant 137 : index
    %775 = memref.load %arg2[%c137] : memref<144xf32, #tpu.memory_space<smem>>
    %776 = vector.extract_strided_slice %21 {offsets = [3, 0, 0], sizes = [1, 8, 16], strides = [1, 1, 1]} : vector<4x8x16xf32> to vector<1x8x16xf32>
    %777 = vector.shape_cast %776 : vector<1x8x16xf32> to vector<8x16xf32>
    %778 = vector.broadcast %775 : f32 to vector<8x16xf32>
    %779 = arith.mulf %778, %777 : vector<8x16xf32>
    %780 = arith.subf %774, %779 : vector<8x16xf32>
    %c111 = arith.constant 111 : index
    %781 = memref.load %arg2[%c111] : memref<144xf32, #tpu.memory_space<smem>>
    %782 = vector.extract_strided_slice %24 {offsets = [0, 0, 0], sizes = [1, 8, 16], strides = [1, 1, 1]} : vector<4x8x16xf32> to vector<1x8x16xf32>
    %783 = vector.shape_cast %782 : vector<1x8x16xf32> to vector<8x16xf32>
    %784 = vector.broadcast %781 : f32 to vector<8x16xf32>
    %785 = arith.mulf %784, %783 : vector<8x16xf32>
    %786 = arith.subf %780, %785 : vector<8x16xf32>
    %c120 = arith.constant 120 : index
    %787 = memref.load %arg2[%c120] : memref<144xf32, #tpu.memory_space<smem>>
    %788 = vector.extract_strided_slice %24 {offsets = [1, 0, 0], sizes = [1, 8, 16], strides = [1, 1, 1]} : vector<4x8x16xf32> to vector<1x8x16xf32>
    %789 = vector.shape_cast %788 : vector<1x8x16xf32> to vector<8x16xf32>
    %790 = vector.broadcast %787 : f32 to vector<8x16xf32>
    %791 = arith.mulf %790, %789 : vector<8x16xf32>
    %792 = arith.subf %786, %791 : vector<8x16xf32>
    %c129 = arith.constant 129 : index
    %793 = memref.load %arg2[%c129] : memref<144xf32, #tpu.memory_space<smem>>
    %794 = vector.extract_strided_slice %24 {offsets = [2, 0, 0], sizes = [1, 8, 16], strides = [1, 1, 1]} : vector<4x8x16xf32> to vector<1x8x16xf32>
    %795 = vector.shape_cast %794 : vector<1x8x16xf32> to vector<8x16xf32>
    %796 = vector.broadcast %793 : f32 to vector<8x16xf32>
    %797 = arith.mulf %796, %795 : vector<8x16xf32>
    %798 = arith.subf %792, %797 : vector<8x16xf32>
    %c138 = arith.constant 138 : index
    %799 = memref.load %arg2[%c138] : memref<144xf32, #tpu.memory_space<smem>>
    %800 = vector.extract_strided_slice %24 {offsets = [3, 0, 0], sizes = [1, 8, 16], strides = [1, 1, 1]} : vector<4x8x16xf32> to vector<1x8x16xf32>
    %801 = vector.shape_cast %800 : vector<1x8x16xf32> to vector<8x16xf32>
    %802 = vector.broadcast %799 : f32 to vector<8x16xf32>
    %803 = arith.mulf %802, %801 : vector<8x16xf32>
    %804 = arith.subf %798, %803 : vector<8x16xf32>
    %c112 = arith.constant 112 : index
    %805 = memref.load %arg2[%c112] : memref<144xf32, #tpu.memory_space<smem>>
    %806 = vector.extract_strided_slice %1 {offsets = [0, 0, 0], sizes = [1, 8, 16], strides = [1, 1, 1]} : vector<4x8x16xf32> to vector<1x8x16xf32>
    %807 = vector.shape_cast %806 : vector<1x8x16xf32> to vector<8x16xf32>
    %808 = vector.broadcast %805 : f32 to vector<8x16xf32>
    %809 = arith.mulf %808, %807 : vector<8x16xf32>
    %810 = arith.subf %804, %809 : vector<8x16xf32>
    %c121 = arith.constant 121 : index
    %811 = memref.load %arg2[%c121] : memref<144xf32, #tpu.memory_space<smem>>
    %812 = vector.extract_strided_slice %1 {offsets = [1, 0, 0], sizes = [1, 8, 16], strides = [1, 1, 1]} : vector<4x8x16xf32> to vector<1x8x16xf32>
    %813 = vector.shape_cast %812 : vector<1x8x16xf32> to vector<8x16xf32>
    %814 = vector.broadcast %811 : f32 to vector<8x16xf32>
    %815 = arith.mulf %814, %813 : vector<8x16xf32>
    %816 = arith.subf %810, %815 : vector<8x16xf32>
    %c130 = arith.constant 130 : index
    %817 = memref.load %arg2[%c130] : memref<144xf32, #tpu.memory_space<smem>>
    %818 = vector.extract_strided_slice %1 {offsets = [2, 0, 0], sizes = [1, 8, 16], strides = [1, 1, 1]} : vector<4x8x16xf32> to vector<1x8x16xf32>
    %819 = vector.shape_cast %818 : vector<1x8x16xf32> to vector<8x16xf32>
    %820 = vector.broadcast %817 : f32 to vector<8x16xf32>
    %821 = arith.mulf %820, %819 : vector<8x16xf32>
    %822 = arith.subf %816, %821 : vector<8x16xf32>
    %c139 = arith.constant 139 : index
    %823 = memref.load %arg2[%c139] : memref<144xf32, #tpu.memory_space<smem>>
    %824 = vector.extract_strided_slice %1 {offsets = [3, 0, 0], sizes = [1, 8, 16], strides = [1, 1, 1]} : vector<4x8x16xf32> to vector<1x8x16xf32>
    %825 = vector.shape_cast %824 : vector<1x8x16xf32> to vector<8x16xf32>
    %826 = vector.broadcast %823 : f32 to vector<8x16xf32>
    %827 = arith.mulf %826, %825 : vector<8x16xf32>
    %828 = arith.subf %822, %827 : vector<8x16xf32>
    %c113 = arith.constant 113 : index
    %829 = memref.load %arg2[%c113] : memref<144xf32, #tpu.memory_space<smem>>
    %830 = vector.extract_strided_slice %27 {offsets = [0, 0, 0], sizes = [1, 8, 16], strides = [1, 1, 1]} : vector<4x8x16xf32> to vector<1x8x16xf32>
    %831 = vector.shape_cast %830 : vector<1x8x16xf32> to vector<8x16xf32>
    %832 = vector.broadcast %829 : f32 to vector<8x16xf32>
    %833 = arith.mulf %832, %831 : vector<8x16xf32>
    %834 = arith.subf %828, %833 : vector<8x16xf32>
    %c122 = arith.constant 122 : index
    %835 = memref.load %arg2[%c122] : memref<144xf32, #tpu.memory_space<smem>>
    %836 = vector.extract_strided_slice %27 {offsets = [1, 0, 0], sizes = [1, 8, 16], strides = [1, 1, 1]} : vector<4x8x16xf32> to vector<1x8x16xf32>
    %837 = vector.shape_cast %836 : vector<1x8x16xf32> to vector<8x16xf32>
    %838 = vector.broadcast %835 : f32 to vector<8x16xf32>
    %839 = arith.mulf %838, %837 : vector<8x16xf32>
    %840 = arith.subf %834, %839 : vector<8x16xf32>
    %c131 = arith.constant 131 : index
    %841 = memref.load %arg2[%c131] : memref<144xf32, #tpu.memory_space<smem>>
    %842 = vector.extract_strided_slice %27 {offsets = [2, 0, 0], sizes = [1, 8, 16], strides = [1, 1, 1]} : vector<4x8x16xf32> to vector<1x8x16xf32>
    %843 = vector.shape_cast %842 : vector<1x8x16xf32> to vector<8x16xf32>
    %844 = vector.broadcast %841 : f32 to vector<8x16xf32>
    %845 = arith.mulf %844, %843 : vector<8x16xf32>
    %846 = arith.subf %840, %845 : vector<8x16xf32>
    %c140 = arith.constant 140 : index
    %847 = memref.load %arg2[%c140] : memref<144xf32, #tpu.memory_space<smem>>
    %848 = vector.extract_strided_slice %27 {offsets = [3, 0, 0], sizes = [1, 8, 16], strides = [1, 1, 1]} : vector<4x8x16xf32> to vector<1x8x16xf32>
    %849 = vector.shape_cast %848 : vector<1x8x16xf32> to vector<8x16xf32>
    %850 = vector.broadcast %847 : f32 to vector<8x16xf32>
    %851 = arith.mulf %850, %849 : vector<8x16xf32>
    %852 = arith.subf %846, %851 : vector<8x16xf32>
    %c114 = arith.constant 114 : index
    %853 = memref.load %arg2[%c114] : memref<144xf32, #tpu.memory_space<smem>>
    %854 = vector.extract_strided_slice %30 {offsets = [0, 0, 0], sizes = [1, 8, 16], strides = [1, 1, 1]} : vector<4x8x16xf32> to vector<1x8x16xf32>
    %855 = vector.shape_cast %854 : vector<1x8x16xf32> to vector<8x16xf32>
    %856 = vector.broadcast %853 : f32 to vector<8x16xf32>
    %857 = arith.mulf %856, %855 : vector<8x16xf32>
    %858 = arith.subf %852, %857 : vector<8x16xf32>
    %c123 = arith.constant 123 : index
    %859 = memref.load %arg2[%c123] : memref<144xf32, #tpu.memory_space<smem>>
    %860 = vector.extract_strided_slice %30 {offsets = [1, 0, 0], sizes = [1, 8, 16], strides = [1, 1, 1]} : vector<4x8x16xf32> to vector<1x8x16xf32>
    %861 = vector.shape_cast %860 : vector<1x8x16xf32> to vector<8x16xf32>
    %862 = vector.broadcast %859 : f32 to vector<8x16xf32>
    %863 = arith.mulf %862, %861 : vector<8x16xf32>
    %864 = arith.subf %858, %863 : vector<8x16xf32>
    %c132 = arith.constant 132 : index
    %865 = memref.load %arg2[%c132] : memref<144xf32, #tpu.memory_space<smem>>
    %866 = vector.extract_strided_slice %30 {offsets = [2, 0, 0], sizes = [1, 8, 16], strides = [1, 1, 1]} : vector<4x8x16xf32> to vector<1x8x16xf32>
    %867 = vector.shape_cast %866 : vector<1x8x16xf32> to vector<8x16xf32>
    %868 = vector.broadcast %865 : f32 to vector<8x16xf32>
    %869 = arith.mulf %868, %867 : vector<8x16xf32>
    %870 = arith.subf %864, %869 : vector<8x16xf32>
    %c141 = arith.constant 141 : index
    %871 = memref.load %arg2[%c141] : memref<144xf32, #tpu.memory_space<smem>>
    %872 = vector.extract_strided_slice %30 {offsets = [3, 0, 0], sizes = [1, 8, 16], strides = [1, 1, 1]} : vector<4x8x16xf32> to vector<1x8x16xf32>
    %873 = vector.shape_cast %872 : vector<1x8x16xf32> to vector<8x16xf32>
    %874 = vector.broadcast %871 : f32 to vector<8x16xf32>
    %875 = arith.mulf %874, %873 : vector<8x16xf32>
    %876 = arith.subf %870, %875 : vector<8x16xf32>
    %c115 = arith.constant 115 : index
    %877 = memref.load %arg2[%c115] : memref<144xf32, #tpu.memory_space<smem>>
    %878 = vector.extract_strided_slice %15 {offsets = [0, 0, 0], sizes = [1, 8, 16], strides = [1, 1, 1]} : vector<4x8x16xf32> to vector<1x8x16xf32>
    %879 = vector.shape_cast %878 : vector<1x8x16xf32> to vector<8x16xf32>
    %880 = vector.broadcast %877 : f32 to vector<8x16xf32>
    %881 = arith.mulf %880, %879 : vector<8x16xf32>
    %882 = arith.subf %876, %881 : vector<8x16xf32>
    %c124 = arith.constant 124 : index
    %883 = memref.load %arg2[%c124] : memref<144xf32, #tpu.memory_space<smem>>
    %884 = vector.extract_strided_slice %15 {offsets = [1, 0, 0], sizes = [1, 8, 16], strides = [1, 1, 1]} : vector<4x8x16xf32> to vector<1x8x16xf32>
    %885 = vector.shape_cast %884 : vector<1x8x16xf32> to vector<8x16xf32>
    %886 = vector.broadcast %883 : f32 to vector<8x16xf32>
    %887 = arith.mulf %886, %885 : vector<8x16xf32>
    %888 = arith.subf %882, %887 : vector<8x16xf32>
    %c133 = arith.constant 133 : index
    %889 = memref.load %arg2[%c133] : memref<144xf32, #tpu.memory_space<smem>>
    %890 = vector.extract_strided_slice %15 {offsets = [2, 0, 0], sizes = [1, 8, 16], strides = [1, 1, 1]} : vector<4x8x16xf32> to vector<1x8x16xf32>
    %891 = vector.shape_cast %890 : vector<1x8x16xf32> to vector<8x16xf32>
    %892 = vector.broadcast %889 : f32 to vector<8x16xf32>
    %893 = arith.mulf %892, %891 : vector<8x16xf32>
    %894 = arith.subf %888, %893 : vector<8x16xf32>
    %c142 = arith.constant 142 : index
    %895 = memref.load %arg2[%c142] : memref<144xf32, #tpu.memory_space<smem>>
    %896 = vector.extract_strided_slice %15 {offsets = [3, 0, 0], sizes = [1, 8, 16], strides = [1, 1, 1]} : vector<4x8x16xf32> to vector<1x8x16xf32>
    %897 = vector.shape_cast %896 : vector<1x8x16xf32> to vector<8x16xf32>
    %898 = vector.broadcast %895 : f32 to vector<8x16xf32>
    %899 = arith.mulf %898, %897 : vector<8x16xf32>
    %900 = arith.subf %894, %899 : vector<8x16xf32>
    %c116 = arith.constant 116 : index
    %901 = memref.load %arg2[%c116] : memref<144xf32, #tpu.memory_space<smem>>
    %902 = vector.extract_strided_slice %33 {offsets = [0, 0, 0], sizes = [1, 8, 16], strides = [1, 1, 1]} : vector<4x8x16xf32> to vector<1x8x16xf32>
    %903 = vector.shape_cast %902 : vector<1x8x16xf32> to vector<8x16xf32>
    %904 = vector.broadcast %901 : f32 to vector<8x16xf32>
    %905 = arith.mulf %904, %903 : vector<8x16xf32>
    %906 = arith.subf %900, %905 : vector<8x16xf32>
    %c125 = arith.constant 125 : index
    %907 = memref.load %arg2[%c125] : memref<144xf32, #tpu.memory_space<smem>>
    %908 = vector.extract_strided_slice %33 {offsets = [1, 0, 0], sizes = [1, 8, 16], strides = [1, 1, 1]} : vector<4x8x16xf32> to vector<1x8x16xf32>
    %909 = vector.shape_cast %908 : vector<1x8x16xf32> to vector<8x16xf32>
    %910 = vector.broadcast %907 : f32 to vector<8x16xf32>
    %911 = arith.mulf %910, %909 : vector<8x16xf32>
    %912 = arith.subf %906, %911 : vector<8x16xf32>
    %c134 = arith.constant 134 : index
    %913 = memref.load %arg2[%c134] : memref<144xf32, #tpu.memory_space<smem>>
    %914 = vector.extract_strided_slice %33 {offsets = [2, 0, 0], sizes = [1, 8, 16], strides = [1, 1, 1]} : vector<4x8x16xf32> to vector<1x8x16xf32>
    %915 = vector.shape_cast %914 : vector<1x8x16xf32> to vector<8x16xf32>
    %916 = vector.broadcast %913 : f32 to vector<8x16xf32>
    %917 = arith.mulf %916, %915 : vector<8x16xf32>
    %918 = arith.subf %912, %917 : vector<8x16xf32>
    %c143 = arith.constant 143 : index
    %919 = memref.load %arg2[%c143] : memref<144xf32, #tpu.memory_space<smem>>
    %920 = vector.extract_strided_slice %33 {offsets = [3, 0, 0], sizes = [1, 8, 16], strides = [1, 1, 1]} : vector<4x8x16xf32> to vector<1x8x16xf32>
    %921 = vector.shape_cast %920 : vector<1x8x16xf32> to vector<8x16xf32>
    %922 = vector.broadcast %919 : f32 to vector<8x16xf32>
    %923 = arith.mulf %922, %921 : vector<8x16xf32>
    %924 = arith.subf %918, %923 : vector<8x16xf32>
    %925 = arith.mulf %705, %924 : vector<8x16xf32>
    %926 = arith.addf %703, %925 : vector<8x16xf32>
    %c0_i32_24 = arith.constant 0 : i32
    %927 = arith.cmpi eq, %arg1, %c0_i32_24 : i32
    %928 = arith.extui %927 : i1 to i32
    %c0_i32_25 = arith.constant 0 : i32
    %929 = arith.cmpi ne, %928, %c0_i32_25 : i32
    scf.if %929 {
      %c0_30 = arith.constant 0 : index
      %c0_31 = arith.constant 0 : index
      %936 = vector.load %arg8[%c0_30, %c0_31] : memref<8x16xf32, #tpu.memory_space<vmem>>, vector<8x16xf32>
      tpu.vector_store %arg8[%c0_30, %c0_31], %926 {strides = array<i32>} : memref<8x16xf32, #tpu.memory_space<vmem>>, vector<8x16xf32>,
    } else {
    }
    %c0_i32_26 = arith.constant 0 : i32
    %930 = arith.cmpi sgt, %arg1, %c0_i32_26 : i32
    %931 = arith.extui %930 : i1 to i32
    %c0_i32_27 = arith.constant 0 : i32
    %932 = arith.cmpi ne, %931, %c0_i32_27 : i32
    scf.if %932 {
      %c0_30 = arith.constant 0 : index
      %c0_31 = arith.constant 0 : index
      %936 = vector.load %arg8[%c0_30, %c0_31] : memref<8x16xf32, #tpu.memory_space<vmem>>, vector<8x16xf32>
      %937 = arith.addf %936, %926 : vector<8x16xf32>
      %c0_32 = arith.constant 0 : index
      %c0_33 = arith.constant 0 : index
      %938 = vector.load %arg8[%c0_32, %c0_33] : memref<8x16xf32, #tpu.memory_space<vmem>>, vector<8x16xf32>
      tpu.vector_store %arg8[%c0_32, %c0_33], %937 {strides = array<i32>} : memref<8x16xf32, #tpu.memory_space<vmem>>, vector<8x16xf32>,
    } else {
    }
    %c1_i32_28 = arith.constant 1 : i32
    %933 = arith.cmpi eq, %arg1, %c1_i32_28 : i32
    %934 = arith.extui %933 : i1 to i32
    %c0_i32_29 = arith.constant 0 : i32
    %935 = arith.cmpi ne, %934, %c0_i32_29 : i32
    scf.if %935 {
      %c0_30 = arith.constant 0 : index
      %c0_31 = arith.constant 0 : index
      %936 = vector.load %arg8[%c0_30, %c0_31] : memref<8x16xf32, #tpu.memory_space<vmem>>, vector<8x16xf32>
      %937 = vector.shape_cast %936 : vector<8x16xf32> to vector<1x8x16xf32>
      %cst_32 = arith.constant dense<0.000000e+00> : vector<1xf32>
      %938 = vector.multi_reduction <add>, %937, %cst_32 [1, 2] : vector<1x8x16xf32> to vector<1xf32>
      %939 = vector.shape_cast %938 : vector<1xf32> to vector<1x1x1xf32>
      %940 = vector.extract %939[0, 0, 0] : f32 from vector<1x1x1xf32>
      %941 = vector.broadcast %940 : f32 to vector<1x1x1xf32>
      %c0_33 = arith.constant 0 : index
      %c0_34 = arith.constant 0 : index
      %c0_35 = arith.constant 0 : index
      %942 = vector.load %arg7[%c0_33, %c0_34, %c0_35] : memref<1x1x1xf32, #tpu.memory_space<vmem>>, vector<1x1x1xf32>
      tpu.vector_store %arg7[%c0_33, %c0_34, %c0_35], %941 {strides = array<i32>} : memref<1x1x1xf32, #tpu.memory_space<vmem>>, vector<1x1x1xf32>,
    } else {
    }
    return
  }
  func.func @transform_0(%arg0: i32, %arg1: i32) -> i32 {
    %c0_i32 = arith.constant 0 : i32
    %c0_i32_0 = arith.constant 0 : i32
    return %c0_i32 : i32
  }
  func.func @transform_1(%arg0: i32, %arg1: i32) -> i32 {
    %c0_i32 = arith.constant 0 : i32
    %c0_i32_0 = arith.constant 0 : i32
    return %c0_i32 : i32
  }
  func.func @transform_2(%arg0: i32, %arg1: i32) -> (i32, i32, i32, i32) {
    %c0_i32 = arith.constant 0 : i32
    %c0_i32_0 = arith.constant 0 : i32
    %c0_i32_1 = arith.constant 0 : i32
    return %arg0, %c0_i32, %arg1, %c0_i32_0 : i32, i32, i32, i32
  }
  func.func @transform_3(%arg0: i32, %arg1: i32) -> (i32, i32, i32, i32) {
    %c1_i32 = arith.constant 1 : i32
    %0 = arith.muli %arg1, %c1_i32 : i32
    %c1_i32_0 = arith.constant 1 : i32
    %1 = arith.subi %0, %c1_i32_0 : i32
    %c0_i32 = arith.constant 0 : i32
    %2 = arith.maxsi %1, %c0_i32 : i32
    %c0_i32_1 = arith.constant 0 : i32
    %c0_i32_2 = arith.constant 0 : i32
    %c0_i32_3 = arith.constant 0 : i32
    return %arg0, %c0_i32_1, %2, %c0_i32_2 : i32, i32, i32, i32
  }
  func.func @transform_4(%arg0: i32, %arg1: i32) -> (i32, i32, i32, i32) {
    %c1_i32 = arith.constant 1 : i32
    %0 = arith.addi %arg1, %c1_i32 : i32
    %c1_i32_0 = arith.constant 1 : i32
    %1 = arith.muli %0, %c1_i32_0 : i32
    %c1_i32_1 = arith.constant 1 : i32
    %2 = arith.minsi %1, %c1_i32_1 : i32
    %c0_i32 = arith.constant 0 : i32
    %c0_i32_2 = arith.constant 0 : i32
    %c0_i32_3 = arith.constant 0 : i32
    return %arg0, %c0_i32, %2, %c0_i32_2 : i32, i32, i32, i32
  }
  func.func @transform_5(%arg0: i32, %arg1: i32) -> (i32, i32, i32) {
    %c0_i32 = arith.constant 0 : i32
    %c0_i32_0 = arith.constant 0 : i32
    %c0_i32_1 = arith.constant 0 : i32
    return %arg0, %c0_i32, %c0_i32_0 : i32, i32, i32
  }
}

</mosaic_0001>

<llo_original>
// kernel: tpu_custom_call.1
$region0: #{tpu_custom_call.1}
  #allocation0 [shape = 'u32[]', space=smem, size = 0x4, offset = 0x4, fixed_abs, tag = 'smem constant byte address 0x4 - core index']
  #allocation1 [shape = 'u32[144,128]{1,0:T(1,128)}', space=vmem, size = 0x12000, scoped, tag = 'internal scratch']
  #allocation2 [shape = 'f32[8,16]{1,0:T(8,128)}', space=vmem, size = 0x1000, scoped, tag = 'scratch operand']
  %s0 = inlined_call_operand.hbm [shape: f32[144], index: 0, kind: input, shape index: {}]
  %s1 = inlined_call_operand.vmem [shape: f32[4], index: 1, kind: input, shape index: {}]
  %s2 = inlined_call_operand.hbm [shape: f32[2,4,16,16], index: 2, kind: input, shape index: {}]
  %s3 = inlined_call_operand.hbm [shape: f32[2,4,16,16], index: 3, kind: input, shape index: {}]
  %s4 = inlined_call_operand.hbm [shape: f32[2,4,16,16], index: 4, kind: input, shape index: {}]
  %s5 = inlined_call_operand.vmem [shape: f32[2,1,1], index: 5, kind: output, shape index: {}]
  %s6 = sld [smem:[#allocation0]]
  $region85: #{tpu_custom_call.1} parent=0
    _
  %s8 = ssub.s32 1, %s6
  %s9 = scalar_select 0, %s8, %s6
  $region1: #{tpu_custom_call.1} parent=0
    #allocation3 [shape = 'u8[1024]{0}', space=smem, size = 0x400, scoped, tag = 'input window, operand 0, single buffered']
    #allocation4 [shape = 's32[2]{0}', space=sflag, size = 0x8, scoped, tag = 'scoped memory for tpu_custom_call.1']
    #allocation5 [shape = 's32[2]{0}', space=sflag, size = 0x8, scoped, tag = 'scoped memory for tpu_custom_call.1']
    #allocation6 [shape = 's32[2]{0}', space=sflag, size = 0x8, scoped, tag = 'scoped memory for tpu_custom_call.1']
    #allocation7 [shape = 'u8[512]{0}', space=smem, size = 0x200, scoped, tag = 'input window, operand 1, single buffered']
    #allocation8 [shape = 'u8[32768]{0}', space=vmem, size = 0x8000, scoped, tag = 'input window, operand 2']
    #allocation9 [shape = 'u8[32768]{0}', space=vmem, size = 0x8000, scoped, tag = 'input window, operand 3']
    #allocation10 [shape = 's32[2]{0}', space=sflag, size = 0x8, scoped, tag = 'scoped memory for tpu_custom_call.1']
    #allocation11 [shape = 'u8[32768]{0}', space=vmem, size = 0x8000, scoped, tag = 'input window, operand 4']
    %10 = vsyncpa [#allocation5], 0
    %11 = vsyncpa [#allocation6], 0
    %12 = vsyncpa [#allocation4], 0
    %s13 = scalar_lea.sflag [#allocation4], 1
    %14 = vsyncpa %s13, 0
    %15 = vsyncpa [#allocation10], 0
    %s16 = scalar_lea.sflag [#allocation10], 1
    %17 = vsyncpa %s16, 0
    loop: start=0, step=1, limit=6
    $region2: #{tpu_custom_call.1} parent=1 // loop_pre_header
      _
    $region3: #{tpu_custom_call.1} parent=1 // loop_header
      %s19 = sphi 0, %s23
      %p20 = scmp.ge.s32.totalorder %s19, 6
      %s26 = sphi 0, %s38
      %s27 = sphi 0, %s34
      %s28 = sphi 0, %s26
      %s29 = sphi 0, %s27
      %s30 = sphi 0, %s28
      %s31 = sphi 0, %s29
      %s39 = sphi 0, %s39
      %s41 = sphi 0, %s39
      %s42 = sphi 0, %s41
      %s56 = sphi 0, %s42
      %s60 = sphi 0, %s60
      %s62 = sphi 0, %s60
      %s63 = sphi 0, %s62
      %s77 = sphi 0, %s63
      %s85 = sphi 0, %s87
      %s88 = sphi 0, %s85
      %s89 = sphi 0, %s88
      %s105 = sphi 0, %s89
      %s119 = sphi 0, %s121
      %s122 = sphi 0, %s119
      %s123 = sphi 0, %s122
      %s139 = sphi 0, %s123
      %s153 = sphi 0, %s155
      %s156 = sphi 0, %s153
      %s157 = sphi 0, %s156
      %s173 = sphi 0, %s157
      %s179 = sphi 0, %s181
      %s182 = sphi 0, %s179
      %s183 = sphi 0, %s182
      %s199 = sphi 0, %s183
    $region4: #{tpu_custom_call.1} parent=1 // loop_header_branch
      %22 = sbr.rel (%p20) target = $region8
    $region5: #{tpu_custom_call.1} parent=1 // loop_body
      %s24 = ssub.s32 %s19, 1
      %s25 = ssub.s32 %s19, 2
      %s32 = sadd.s32 1, %s27
      %p33 = scmp.ge.s32.totalorder %s32, 2
      %s34 = scalar_select %p33, 0, %s32
      %s35 = sadd.s32 1, %s26
      %s36 = scalar_select %p33, %s35, %s26
      %p37 = scmp.ge.s32.totalorder %s36, 2
      %s38 = scalar_select %p37, 0, %s36
      %s40 = sadd.s32 %s39, 1
      %p43 = scmp.eq.s32.totalorder %s19, 3
      %p44 = scmp.ne.s32.totalorder %s39, %s41
      %p45 = scmp.eq.s32.totalorder %s19, 0
      %p46 = por %p44, %p45
      %p47 = scmp.ne.s32.totalorder %s39, %s41
      %p48 = scmp.eq.s32.totalorder %s24, 3
      %p49 = por %p47, %p48
      %p50 = scmp.ne.s32.totalorder %s41, %s42
      %p51 = scmp.eq.s32.totalorder %s24, 0
      %p52 = por %p50, %p51
      %p53 = scmp.ne.s32.totalorder %s41, %s42
      %p54 = scmp.eq.s32.totalorder %s25, 3
      %p55 = por %p53, %p54
      %p57 = scmp.ne.s32.totalorder %s42, %s56
      %p58 = scmp.eq.s32.totalorder %s25, 0
      %p59 = por %p57, %p58
      %s61 = sadd.s32 %s60, 1
      %p64 = scmp.eq.s32.totalorder %s19, 3
      %p65 = scmp.ne.s32.totalorder %s60, %s62
      %p66 = scmp.eq.s32.totalorder %s19, 0
      %p67 = por %p65, %p66
      %p68 = scmp.ne.s32.totalorder %s60, %s62
      %p69 = scmp.eq.s32.totalorder %s24, 3
      %p70 = por %p68, %p69
      %p71 = scmp.ne.s32.totalorder %s62, %s63
      %p72 = scmp.eq.s32.totalorder %s24, 0
      %p73 = por %p71, %p72
      %p74 = scmp.ne.s32.totalorder %s62, %s63
      %p75 = scmp.eq.s32.totalorder %s25, 3
      %p76 = por %p74, %p75
      %p78 = scmp.ne.s32.totalorder %s63, %s77
      %p79 = scmp.eq.s32.totalorder %s25, 0
      %p80 = por %p78, %p79
      %s81 = ssub.s32 %s26, %s38
      %s82 = ssub.s32 %s27, %s34
      %s83 = sor.u32 %s81, %s82
      %p84 = scmp.eq.s32.totalorder %s83, 0
      %s86 = sadd.s32 %s85, 1
      %s87 = scalar_select %p84, %s85, %s86
      %p90 = pneg %p84
      %p91 = scmp.eq.s32.totalorder %s19, 3
      %p92 = por %p90, %p91
      %p93 = scmp.ne.s32.totalorder %s85, %s88
      %p94 = scmp.eq.s32.totalorder %s19, 0
      %p95 = por %p93, %p94
      %p96 = scmp.ne.s32.totalorder %s85, %s88
      %p97 = scmp.eq.s32.totalorder %s24, 3
      %p98 = por %p96, %p97
      %p99 = scmp.ne.s32.totalorder %s88, %s89
      %p100 = scmp.eq.s32.totalorder %s24, 0
      %p101 = por %p99, %p100
      %p102 = scmp.ne.s32.totalorder %s88, %s89
      %p103 = scmp.eq.s32.totalorder %s25, 3
      %p104 = por %p102, %p103
      %p106 = scmp.ne.s32.totalorder %s89, %s105
      %p107 = scmp.eq.s32.totalorder %s25, 0
      %p108 = por %p106, %p107
      %s109 = ssub.s32 %s27, 1
      %p110 = scmp.gt.s32.totalorder %s109, 0
      %s111 = scalar_select %p110, %s109, 0
      %s112 = ssub.s32 %s34, 1
      %p113 = scmp.gt.s32.totalorder %s112, 0
      %s114 = scalar_select %p113, %s112, 0
      %s115 = ssub.s32 %s26, %s38
      %s116 = ssub.s32 %s111, %s114
      %s117 = sor.u32 %s115, %s116
      %p118 = scmp.eq.s32.totalorder %s117, 0
      %s120 = sadd.s32 %s119, 1
      %s121 = scalar_select %p118, %s119, %s120
      %p124 = pneg %p118
      %p125 = scmp.eq.s32.totalorder %s19, 3
      %p126 = por %p124, %p125
      %p127 = scmp.ne.s32.totalorder %s119, %s122
      %p128 = scmp.eq.s32.totalorder %s19, 0
      %p129 = por %p127, %p128
      %p130 = scmp.ne.s32.totalorder %s119, %s122
      %p131 = scmp.eq.s32.totalorder %s24, 3
      %p132 = por %p130, %p131
      %p133 = scmp.ne.s32.totalorder %s122, %s123
      %p134 = scmp.eq.s32.totalorder %s24, 0
      %p135 = por %p133, %p134
      %p136 = scmp.ne.s32.totalorder %s122, %s123
      %p137 = scmp.eq.s32.totalorder %s25, 3
      %p138 = por %p136, %p137
      %p140 = scmp.ne.s32.totalorder %s123, %s139
      %p141 = scmp.eq.s32.totalorder %s25, 0
      %p142 = por %p140, %p141
      %s143 = sadd.s32 %s27, 1
      %p144 = scmp.lt.s32.totalorder %s143, 1
      %s145 = scalar_select %p144, %s143, 1
      %s146 = sadd.s32 %s34, 1
      %p147 = scmp.lt.s32.totalorder %s146, 1
      %s148 = scalar_select %p147, %s146, 1
      %s149 = ssub.s32 %s26, %s38
      %s150 = ssub.s32 %s145, %s148
      %s151 = sor.u32 %s149, %s150
      %p152 = scmp.eq.s32.totalorder %s151, 0
      %s154 = sadd.s32 %s153, 1
      %s155 = scalar_select %p152, %s153, %s154
      %p158 = pneg %p152
      %p159 = scmp.eq.s32.totalorder %s19, 3
      %p160 = por %p158, %p159
      %p161 = scmp.ne.s32.totalorder %s153, %s156
      %p162 = scmp.eq.s32.totalorder %s19, 0
      %p163 = por %p161, %p162
      %p164 = scmp.ne.s32.totalorder %s153, %s156
      %p165 = scmp.eq.s32.totalorder %s24, 3
      %p166 = por %p164, %p165
      %p167 = scmp.ne.s32.totalorder %s156, %s157
      %p168 = scmp.eq.s32.totalorder %s24, 0
      %p169 = por %p167, %p168
      %p170 = scmp.ne.s32.totalorder %s156, %s157
      %p171 = scmp.eq.s32.totalorder %s25, 3
      %p172 = por %p170, %p171
      %p174 = scmp.ne.s32.totalorder %s157, %s173
      %p175 = scmp.eq.s32.totalorder %s25, 0
      %p176 = por %p174, %p175
      %s177 = ssub.s32 %s26, %s38
      %p178 = scmp.eq.s32.totalorder %s177, 0
      %s180 = sadd.s32 %s179, 1
      %s181 = scalar_select %p178, %s179, %s180
      %p184 = pneg %p178
      %p185 = scmp.eq.s32.totalorder %s19, 3
      %p186 = por %p184, %p185
      %p187 = scmp.ne.s32.totalorder %s179, %s182
      %p188 = scmp.eq.s32.totalorder %s19, 0
      %p189 = por %p187, %p188
      %p190 = scmp.ne.s32.totalorder %s179, %s182
      %p191 = scmp.eq.s32.totalorder %s24, 3
      %p192 = por %p190, %p191
      %p193 = scmp.ne.s32.totalorder %s182, %s183
      %p194 = scmp.eq.s32.totalorder %s24, 0
      %p195 = por %p193, %p194
      %p196 = scmp.ne.s32.totalorder %s182, %s183
      %p197 = scmp.eq.s32.totalorder %s25, 3
      %p198 = por %p196, %p197
      %p200 = scmp.ne.s32.totalorder %s183, %s199
      %p201 = scmp.eq.s32.totalorder %s25, 0
      %p202 = por %p200, %p201
      %p203 = scmp.le.s32.totalorder 1, %s19
      %p204 = scmp.lt.s32.totalorder %s19, 5
      %p205 = pnand %p203, %p204
      %p206 = pneg %p205
      // Predicated region
      $region9: #{tpu_custom_call.1} parent=5 // pred_check
        _
      $region10: #{tpu_custom_call.1} parent=5 // pred_check_branch
        %208 = sbr.rel (%p205) target = $region12
      $region11: #{tpu_custom_call.1} parent=5 // pred_region
        %s209 = ssub.s32 %s19, 1
        // Predicated region
        $region13: #{tpu_custom_call.1} parent=11 // pred_check
          %p210 = pneg %p52
        $region14: #{tpu_custom_call.1} parent=11 // pred_check_branch
          %212 = sbr.rel (%p210) target = $region16
        $region15: #{tpu_custom_call.1} parent=11 // pred_region
          %s214 = ssub.s32 32, 32
          %215 = vsyncadd [#allocation5], %s214
          %218 = dma.hbm_to_smem %s0, 32, [#allocation3], [#allocation5]
        $region16: #{tpu_custom_call.1} parent=11 // pred_fallthru
          _
        // Predicated region
        $region17: #{tpu_custom_call.1} parent=11 // pred_check
          %p219 = pneg %p73
        $region18: #{tpu_custom_call.1} parent=11 // pred_check_branch
          %221 = sbr.rel (%p219) target = $region20
        $region19: #{tpu_custom_call.1} parent=11 // pred_region
          %s223 = ssub.s32 16, 16
          %224 = vsyncadd [#allocation6], %s223
          %s226 = sshll.u32 %s1, 4
          %s227 = int_to_ptr.vmem [resolvable:$true] %s226
          %229 = dma.vmem_to_smem %s227, 16, [#allocation7], [#allocation6]
        $region20: #{tpu_custom_call.1} parent=11 // pred_fallthru
          _
      $region12: #{tpu_custom_call.1} parent=5 // pred_fallthru
        _
      %p230 = scmp.lt.s32.totalorder %s19, 4
      // Predicated region
      $region21: #{tpu_custom_call.1} parent=5 // pred_check
        %p231 = pneg %p230
      $region22: #{tpu_custom_call.1} parent=5 // pred_check_branch
        %233 = sbr.rel (%p231) target = $region24
      $region23: #{tpu_custom_call.1} parent=5 // pred_region
        // Predicated region
        $region25: #{tpu_custom_call.1} parent=23 // pred_check
          %p234 = pneg %p95
        $region26: #{tpu_custom_call.1} parent=23 // pred_check_branch
          %236 = sbr.rel (%p234) target = $region28
        $region27: #{tpu_custom_call.1} parent=23 // pred_region
          %s237 = sand.u32 %s85, 1
          %s238 = scalar_lea.sflag [#allocation4], %s237
          %s239 = sand.u32 %s85, 1
          %s240 = smul.addr %s239, 32
          %s241 = scalar_lea.vmem [#allocation8], %s240
          %s243 = ssub.s32 512, 512
          %244 = vsyncadd %s238, %s243
          %s245 = smul.addr %s26, 8
          %s246 = sadd.s32 %s27, %s245
          %s247 = smul.addr %s246, 128
          %s248 = scalar_lea.hbm %s2, %s247
          %s249 = sshll.u32 %s241, 4
          %s250 = int_to_ptr.vmem [resolvable:$true] %s249
          %255 = dma.hbm_to_vmem [thread:$0]  %s248, 512, %s250, %s238, 256, 128, 8
        $region28: #{tpu_custom_call.1} parent=23 // pred_fallthru
          _
        // Predicated region
        $region29: #{tpu_custom_call.1} parent=23 // pred_check
          %p256 = pneg %p129
        $region30: #{tpu_custom_call.1} parent=23 // pred_check_branch
          %258 = sbr.rel (%p256) target = $region32
        $region31: #{tpu_custom_call.1} parent=23 // pred_region
          %s259 = sand.u32 %s19, 1
          %s260 = scalar_lea.sflag [#allocation10], %s259
          %s261 = sand.u32 %s119, 1
          %s262 = smul.addr %s261, 32
          %s263 = scalar_lea.vmem [#allocation9], %s262
          %s264 = ssub.s32 %s27, 1
          %p265 = scmp.gt.s32.totalorder %s264, 0
          %s266 = scalar_select %p265, %s264, 0
          %s268 = ssub.s32 512, 512
          %269 = vsyncadd %s260, %s268
          %s270 = smul.addr %s26, 8
          %s271 = sadd.s32 %s266, %s270
          %s272 = smul.addr %s271, 128
          %s273 = scalar_lea.hbm %s3, %s272
          %s274 = sshll.u32 %s263, 4
          %s275 = int_to_ptr.vmem [resolvable:$true] %s274
          %280 = dma.hbm_to_vmem [thread:$0]  %s273, 512, %s275, %s260, 256, 128, 8
        $region32: #{tpu_custom_call.1} parent=23 // pred_fallthru
          _
        // Predicated region
        $region33: #{tpu_custom_call.1} parent=23 // pred_check
          %p281 = pneg %p163
        $region34: #{tpu_custom_call.1} parent=23 // pred_check_branch
          %283 = sbr.rel (%p281) target = $region36
        $region35: #{tpu_custom_call.1} parent=23 // pred_region
          %s284 = sand.u32 %s19, 1
          %s285 = scalar_lea.sflag [#allocation10], %s284
          %s286 = sand.u32 %s153, 1
          %s287 = smul.addr %s286, 32
          %s288 = scalar_lea.vmem [#allocation11], %s287
          %s289 = sadd.s32 %s27, 1
          %p290 = scmp.lt.s32.totalorder %s289, 1
          %s291 = scalar_select %p290, %s289, 1
          %s293 = ssub.s32 512, 512
          %294 = vsyncadd %s285, %s293
          %s295 = smul.addr %s26, 8
          %s296 = sadd.s32 %s291, %s295
          %s297 = smul.addr %s296, 128
          %s298 = scalar_lea.hbm %s4, %s297
          %s299 = sshll.u32 %s288, 4
          %s300 = int_to_ptr.vmem [resolvable:$true] %s299
          %305 = dma.hbm_to_vmem [thread:$0]  %s298, 512, %s300, %s285, 256, 128, 8
        $region36: #{tpu_custom_call.1} parent=23 // pred_fallthru
          _
      $region24: #{tpu_custom_call.1} parent=5 // pred_fallthru
        _
      %p306 = scmp.le.s32.totalorder 1, %s19
      %p307 = scmp.lt.s32.totalorder %s19, 5
      %p308 = pnand %p306, %p307
      %p309 = pneg %p308
      // Predicated region
      $region37: #{tpu_custom_call.1} parent=5 // pred_check
        _
      $region38: #{tpu_custom_call.1} parent=5 // pred_check_branch
        %311 = sbr.rel (%p308) target = $region40
      $region39: #{tpu_custom_call.1} parent=5 // pred_region
        %s312 = ssub.s32 %s19, 1
        // Predicated region
        $region41: #{tpu_custom_call.1} parent=39 // pred_check
          %p313 = pneg %p52
        $region42: #{tpu_custom_call.1} parent=39 // pred_check_branch
          %315 = sbr.rel (%p313) target = $region44
        $region43: #{tpu_custom_call.1} parent=39 // pred_region
          %316 = dma.done [#allocation5], 32
        $region44: #{tpu_custom_call.1} parent=39 // pred_fallthru
          _
        // Predicated region
        $region45: #{tpu_custom_call.1} parent=39 // pred_check
          %p317 = pneg %p73
        $region46: #{tpu_custom_call.1} parent=39 // pred_check_branch
          %319 = sbr.rel (%p317) target = $region48
        $region47: #{tpu_custom_call.1} parent=39 // pred_region
          %320 = dma.done [#allocation6], 16
        $region48: #{tpu_custom_call.1} parent=39 // pred_fallthru
          _
        %s321 = sand.u32 %s88, 1
        %s322 = scalar_lea.sflag [#allocation4], %s321
        %s323 = sand.u32 %s88, 1
        %s324 = smul.addr %s323, 32
        %s325 = scalar_lea.vmem [#allocation8], %s324
        // Predicated region
        $region49: #{tpu_custom_call.1} parent=39 // pred_check
          %p326 = pneg %p101
        $region50: #{tpu_custom_call.1} parent=39 // pred_check_branch
          %328 = sbr.rel (%p326) target = $region52
        $region51: #{tpu_custom_call.1} parent=39 // pred_region
          %329 = dma.done %s322, 512
        $region52: #{tpu_custom_call.1} parent=39 // pred_fallthru
          _
        %s330 = sand.u32 %s24, 1
        %s331 = scalar_lea.sflag [#allocation10], %s330
        %s332 = sand.u32 %s122, 1
        %s333 = smul.addr %s332, 32
        %s334 = scalar_lea.vmem [#allocation9], %s333
        // Predicated region
        $region53: #{tpu_custom_call.1} parent=39 // pred_check
          %p335 = pneg %p135
        $region54: #{tpu_custom_call.1} parent=39 // pred_check_branch
          %337 = sbr.rel (%p335) target = $region56
        $region55: #{tpu_custom_call.1} parent=39 // pred_region
          %338 = dma.done %s331, 512
        $region56: #{tpu_custom_call.1} parent=39 // pred_fallthru
          _
        %s339 = sand.u32 %s24, 1
        %s340 = scalar_lea.sflag [#allocation10], %s339
        %s341 = sand.u32 %s156, 1
        %s342 = smul.addr %s341, 32
        %s343 = scalar_lea.vmem [#allocation11], %s342
        // Predicated region
        $region57: #{tpu_custom_call.1} parent=39 // pred_check
          %p344 = pneg %p169
        $region58: #{tpu_custom_call.1} parent=39 // pred_check_branch
          %346 = sbr.rel (%p344) target = $region60
        $region59: #{tpu_custom_call.1} parent=39 // pred_region
          %347 = dma.done %s340, 512
        $region60: #{tpu_custom_call.1} parent=39 // pred_fallthru
          _
        %348 = sfence
        %p349 = pneg %p52
        %p350 = pneg %p49
        %p351 = pneg %p73
        %p352 = pneg %p70
        %s353 = sand.u32 %s88, 1
        %s354 = scalar_lea.sflag [#allocation4], %s353
        %s355 = sand.u32 %s88, 1
        %s356 = smul.addr %s355, 32
        %s357 = scalar_lea.vmem [#allocation8], %s356
        %p358 = pneg %p101
        %p359 = pneg %p98
        %s360 = sand.u32 %s24, 1
        %s361 = scalar_lea.sflag [#allocation10], %s360
        %s362 = sand.u32 %s122, 1
        %s363 = smul.addr %s362, 32
        %s364 = scalar_lea.vmem [#allocation9], %s363
        %p365 = pneg %p135
        %p366 = pneg %p132
        %s367 = sand.u32 %s24, 1
        %s368 = scalar_lea.sflag [#allocation10], %s367
        %s369 = sand.u32 %s156, 1
        %s370 = smul.addr %s369, 32
        %s371 = scalar_lea.vmem [#allocation11], %s370
        %p372 = pneg %p169
        %p373 = pneg %p166
        %p374 = pneg %p195
        %p375 = pneg %p192
        %p376 = scmp.lt.s32.totalorder %s28, 1
        %s377 = scalar_select %p376, %s28, 1
        %s378 = scalar_lea.vmem %s5, %s377
        %s379 = ssub.s32 %s29, 1
        %p380 = scmp.gt.s32.totalorder %s379, 0
        %s381 = scalar_select %p380, %s379, 0
        %s382 = sadd.s32 %s29, 1
        %p383 = scmp.lt.s32.totalorder %s382, 1
        %s384 = scalar_select %p383, %s382, 1
        %p385 = scmp.lt.s32.totalorder %s28, 1
        %s386 = scalar_select %p385, %s28, 1
        %s387 = scalar_lea.vmem %s5, %s386
        %v388 = vld [vmem:[%s325] sm:$0xff]
        %v389 = vld [vmem:[%s325 + $0x8] sm:$0xff]
        %v390 = vld [vmem:[%s325 + $0x10] sm:$0xff]
        %v391 = vld [vmem:[%s325 + $0x18] sm:$0xff]
        %p392 = scmp.gt.s32.totalorder %s29, 0
        %v393 = vld [vmem:[%s334 + $0x7] sm:$0x1]
        %v394 = vld [vmem:[%s334 + $0xf] sm:$0x1]
        %v395 = vld [vmem:[%s334 + $0x17] sm:$0x1]
        %v396 = vld [vmem:[%s334 + $0x1f] sm:$0x1]
        %s397 = scalar_select %p392, 1, 0
        %v398 = vstv %s397
        %vm399 = vcmp.eq.s32.totalorder %v398, 1
        %v400 = vsel %vm399, %v393, 0.0
        %v401 = vsel %vm399, %v394, 0.0
        %v402 = vsel %vm399, %v395, 0.0
        %v403 = vsel %vm399, %v396, 0.0
        %p404 = scmp.lt.s32.totalorder %s29, 1
        %v405 = vld [vmem:[%s343] sm:$0x1]
        %v406 = vld [vmem:[%s343 + $0x8] sm:$0x1]
        %v407 = vld [vmem:[%s343 + $0x10] sm:$0x1]
        %v408 = vld [vmem:[%s343 + $0x18] sm:$0x1]
        %s409 = scalar_select %p404, 1, 0
        %v410 = vstv %s409
        %vm411 = vcmp.eq.s32.totalorder %v410, 1
        %v412 = vsel %vm411, %v405, 0.0
        %v413 = vsel %vm411, %v406, 0.0
        %v414 = vsel %vm411, %v407, 0.0
        %v415 = vsel %vm411, %v408, 0.0
        %v420 = vrot.slane %v388, 7
        %v421 = vrot.slane %v389, 7
        %v422 = vrot.slane %v390, 7
        %v423 = vrot.slane %v391, 7
        %vm428 = vcmask 1040384
        %v429 = vsel %vm428, %v400, %v420
        %v430 = vsel %vm428, %v401, %v421
        %v431 = vsel %vm428, %v402, %v422
        %v432 = vsel %vm428, %v403, %v423
        %v433 = vrot.slane %v388, 1
        %v434 = vrot.slane %v389, 1
        %v435 = vrot.slane %v390, 1
        %v436 = vrot.slane %v391, 1
        %v445 = vrot.slane %v412, 1
        %v446 = vrot.slane %v413, 1
        %v447 = vrot.slane %v414, 1
        %v448 = vrot.slane %v415, 1
        %vm453 = vcmask 1046528
        %v454 = vsel %vm453, %v433, %v445
        %v455 = vsel %vm453, %v434, %v446
        %v456 = vsel %vm453, %v435, %v447
        %v457 = vsel %vm453, %v436, %v448
        %462 = vrot.lane.b32.xlu0 %v429, 1
        %v463 = vpop.permute.xlu0 %462
        %464 = vrot.lane.b32.xlu0 %v430, 1
        %v465 = vpop.permute.xlu0 %464
        %466 = vrot.lane.b32.xlu0 %v431, 1
        %v467 = vpop.permute.xlu0 %466
        %468 = vrot.lane.b32.xlu0 %v432, 1
        %v469 = vpop.permute.xlu0 %468
        %vm474 = vcmask 7168
        %v475 = vsel %vm474, 0.0, %v463
        %v476 = vsel %vm474, 0.0, %v465
        %v477 = vsel %vm474, 0.0, %v467
        %v478 = vsel %vm474, 0.0, %v469
        %479 = vrot.lane.b32.xlu0 %v429, 127
        %v480 = vpop.permute.xlu0 %479
        %481 = vrot.lane.b32.xlu0 %v430, 127
        %v482 = vpop.permute.xlu0 %481
        %483 = vrot.lane.b32.xlu0 %v431, 127
        %v484 = vpop.permute.xlu0 %483
        %485 = vrot.lane.b32.xlu0 %v432, 127
        %v486 = vpop.permute.xlu0 %485
        %vm491 = vcmask 121856
        %v492 = vsel %vm491, %v480, 0.0
        %v493 = vsel %vm491, %v482, 0.0
        %v494 = vsel %vm491, %v484, 0.0
        %v495 = vsel %vm491, %v486, 0.0
        %496 = vrot.lane.b32.xlu0 %v388, 1
        %v497 = vpop.permute.xlu0 %496
        %498 = vrot.lane.b32.xlu0 %v389, 1
        %v499 = vpop.permute.xlu0 %498
        %500 = vrot.lane.b32.xlu0 %v390, 1
        %v501 = vpop.permute.xlu0 %500
        %502 = vrot.lane.b32.xlu0 %v391, 1
        %v503 = vpop.permute.xlu0 %502
        %v508 = vsel %vm474, 0.0, %v497
        %v509 = vsel %vm474, 0.0, %v499
        %v510 = vsel %vm474, 0.0, %v501
        %v511 = vsel %vm474, 0.0, %v503
        %512 = vrot.lane.b32.xlu0 %v388, 127
        %v513 = vpop.permute.xlu0 %512
        %514 = vrot.lane.b32.xlu0 %v389, 127
        %v515 = vpop.permute.xlu0 %514
        %516 = vrot.lane.b32.xlu0 %v390, 127
        %v517 = vpop.permute.xlu0 %516
        %518 = vrot.lane.b32.xlu0 %v391, 127
        %v519 = vpop.permute.xlu0 %518
        %v524 = vsel %vm491, %v513, 0.0
        %v525 = vsel %vm491, %v515, 0.0
        %v526 = vsel %vm491, %v517, 0.0
        %v527 = vsel %vm491, %v519, 0.0
        %532 = vrot.lane.b32.xlu0 %v454, 1
        %v533 = vpop.permute.xlu0 %532
        %534 = vrot.lane.b32.xlu0 %v455, 1
        %v535 = vpop.permute.xlu0 %534
        %536 = vrot.lane.b32.xlu0 %v456, 1
        %v537 = vpop.permute.xlu0 %536
        %538 = vrot.lane.b32.xlu0 %v457, 1
        %v539 = vpop.permute.xlu0 %538
        %v544 = vsel %vm474, 0.0, %v533
        %v545 = vsel %vm474, 0.0, %v535
        %v546 = vsel %vm474, 0.0, %v537
        %v547 = vsel %vm474, 0.0, %v539
        %548 = vrot.lane.b32.xlu0 %v454, 127
        %v549 = vpop.permute.xlu0 %548
        %550 = vrot.lane.b32.xlu0 %v455, 127
        %v551 = vpop.permute.xlu0 %550
        %552 = vrot.lane.b32.xlu0 %v456, 127
        %v553 = vpop.permute.xlu0 %552
        %554 = vrot.lane.b32.xlu0 %v457, 127
        %v555 = vpop.permute.xlu0 %554
        %v560 = vsel %vm491, %v549, 0.0
        %v561 = vsel %vm491, %v551, 0.0
        %v562 = vsel %vm491, %v553, 0.0
        %v563 = vsel %vm491, %v555, 0.0
        %s564 = sld [smem:[#allocation7]]
        %v565 = vstv %s564
        %v566 = vsub.f32 %v388, %v565
        %s567 = sld [smem:[#allocation3]]
        %v568 = vstv %s567
        %v569 = vmul.f32 %v568, %v475
        %v570 = vsub.f32 %v566, %v569
        %s571 = sld [smem:[#allocation3 + $0x9]]
        %v572 = vstv %s571
        %v573 = vmul.f32 %v572, %v476
        %v574 = vsub.f32 %v570, %v573
        %s575 = sld [smem:[#allocation3 + $0x12]]
        %v576 = vstv %s575
        %v577 = vmul.f32 %v576, %v477
        %v578 = vsub.f32 %v574, %v577
        %s579 = sld [smem:[#allocation3 + $0x1b]]
        %v580 = vstv %s579
        %v581 = vmul.f32 %v580, %v478
        %v582 = vsub.f32 %v578, %v581
        %s583 = sld [smem:[#allocation3 + $0x1]]
        %v584 = vstv %s583
        %v585 = vmul.f32 %v584, %v429
        %v586 = vsub.f32 %v582, %v585
        %s587 = sld [smem:[#allocation3 + $0xa]]
        %v588 = vstv %s587
        %v589 = vmul.f32 %v588, %v430
        %v590 = vsub.f32 %v586, %v589
        %s591 = sld [smem:[#allocation3 + $0x13]]
        %v592 = vstv %s591
        %v593 = vmul.f32 %v592, %v431
        %v594 = vsub.f32 %v590, %v593
        %s595 = sld [smem:[#allocation3 + $0x1c]]
        %v596 = vstv %s595
        %v597 = vmul.f32 %v596, %v432
        %v598 = vsub.f32 %v594, %v597
        %s599 = sld [smem:[#allocation3 + $0x2]]
        %v600 = vstv %s599
        %v601 = vmul.f32 %v600, %v492
        %v602 = vsub.f32 %v598, %v601
        %s603 = sld [smem:[#allocation3 + $0xb]]
        %v604 = vstv %s603
        %v605 = vmul.f32 %v604, %v493
        %v606 = vsub.f32 %v602, %v605
        %s607 = sld [smem:[#allocation3 + $0x14]]
        %v608 = vstv %s607
        %v609 = vmul.f32 %v608, %v494
        %v610 = vsub.f32 %v606, %v609
        %s611 = sld [smem:[#allocation3 + $0x1d]]
        %v612 = vstv %s611
        %v613 = vmul.f32 %v612, %v495
        %v614 = vsub.f32 %v610, %v613
        %s615 = sld [smem:[#allocation3 + $0x3]]
        %v616 = vstv %s615
        %v617 = vmul.f32 %v616, %v508
        %v618 = vsub.f32 %v614, %v617
        %s619 = sld [smem:[#allocation3 + $0xc]]
        %v620 = vstv %s619
        %v621 = vmul.f32 %v620, %v509
        %v622 = vsub.f32 %v618, %v621
        %s623 = sld [smem:[#allocation3 + $0x15]]
        %v624 = vstv %s623
        %v625 = vmul.f32 %v624, %v510
        %v626 = vsub.f32 %v622, %v625
        %s627 = sld [smem:[#allocation3 + $0x1e]]
        %v628 = vstv %s627
        %v629 = vmul.f32 %v628, %v511
        %v630 = vsub.f32 %v626, %v629
        %s631 = sld [smem:[#allocation3 + $0x4]]
        %v632 = vstv %s631
        %v633 = vmul.f32 %v632, %v388
        %v634 = vsub.f32 %v630, %v633
        %s635 = sld [smem:[#allocation3 + $0xd]]
        %v636 = vstv %s635
        %v637 = vmul.f32 %v636, %v389
        %v638 = vsub.f32 %v634, %v637
        %s639 = sld [smem:[#allocation3 + $0x16]]
        %v640 = vstv %s639
        %v641 = vmul.f32 %v640, %v390
        %v642 = vsub.f32 %v638, %v641
        %s643 = sld [smem:[#allocation3 + $0x1f]]
        %v644 = vstv %s643
        %v645 = vmul.f32 %v644, %v391
        %v646 = vsub.f32 %v642, %v645
        %s647 = sld [smem:[#allocation3 + $0x5]]
        %v648 = vstv %s647
        %v649 = vmul.f32 %v648, %v524
        %v650 = vsub.f32 %v646, %v649
        %s651 = sld [smem:[#allocation3 + $0xe]]
        %v652 = vstv %s651
        %v653 = vmul.f32 %v652, %v525
        %v654 = vsub.f32 %v650, %v653
        %s655 = sld [smem:[#allocation3 + $0x17]]
        %v656 = vstv %s655
        %v657 = vmul.f32 %v656, %v526
        %v658 = vsub.f32 %v654, %v657
        %s659 = sld [smem:[#allocation3 + $0x20]]
        %v660 = vstv %s659
        %v661 = vmul.f32 %v660, %v527
        %v662 = vsub.f32 %v658, %v661
        %s663 = sld [smem:[#allocation3 + $0x6]]
        %v664 = vstv %s663
        %v665 = vmul.f32 %v664, %v544
        %v666 = vsub.f32 %v662, %v665
        %s667 = sld [smem:[#allocation3 + $0xf]]
        %v668 = vstv %s667
        %v669 = vmul.f32 %v668, %v545
        %v670 = vsub.f32 %v666, %v669
        %s671 = sld [smem:[#allocation3 + $0x18]]
        %v672 = vstv %s671
        %v673 = vmul.f32 %v672, %v546
        %v674 = vsub.f32 %v670, %v673
        %s675 = sld [smem:[#allocation3 + $0x21]]
        %v676 = vstv %s675
        %v677 = vmul.f32 %v676, %v547
        %v678 = vsub.f32 %v674, %v677
        %s679 = sld [smem:[#allocation3 + $0x7]]
        %v680 = vstv %s679
        %v681 = vmul.f32 %v680, %v454
        %v682 = vsub.f32 %v678, %v681
        %s683 = sld [smem:[#allocation3 + $0x10]]
        %v684 = vstv %s683
        %v685 = vmul.f32 %v684, %v455
        %v686 = vsub.f32 %v682, %v685
        %s687 = sld [smem:[#allocation3 + $0x19]]
        %v688 = vstv %s687
        %v689 = vmul.f32 %v688, %v456
        %v690 = vsub.f32 %v686, %v689
        %s691 = sld [smem:[#allocation3 + $0x22]]
        %v692 = vstv %s691
        %v693 = vmul.f32 %v692, %v457
        %v694 = vsub.f32 %v690, %v693
        %s695 = sld [smem:[#allocation3 + $0x8]]
        %v696 = vstv %s695
        %v697 = vmul.f32 %v696, %v560
        %v698 = vsub.f32 %v694, %v697
        %s699 = sld [smem:[#allocation3 + $0x11]]
        %v700 = vstv %s699
        %v701 = vmul.f32 %v700, %v561
        %v702 = vsub.f32 %v698, %v701
        %s703 = sld [smem:[#allocation3 + $0x1a]]
        %v704 = vstv %s703
        %v705 = vmul.f32 %v704, %v562
        %v706 = vsub.f32 %v702, %v705
        %s707 = sld [smem:[#allocation3 + $0x23]]
        %v708 = vstv %s707
        %v709 = vmul.f32 %v708, %v563
        %v710 = vsub.f32 %v706, %v709
        %v711 = vmul.f32 %v388, %v710
        %v712 = vadd.f32 %v711, 0.0
        %s713 = sld [smem:[#allocation7 + $0x1]]
        %v714 = vstv %s713
        %v715 = vsub.f32 %v389, %v714
        %s716 = sld [smem:[#allocation3 + $0x24]]
        %v717 = vstv %s716
        %v718 = vmul.f32 %v717, %v475
        %v719 = vsub.f32 %v715, %v718
        %s720 = sld [smem:[#allocation3 + $0x2d]]
        %v721 = vstv %s720
        %v722 = vmul.f32 %v721, %v476
        %v723 = vsub.f32 %v719, %v722
        %s724 = sld [smem:[#allocation3 + $0x36]]
        %v725 = vstv %s724
        %v726 = vmul.f32 %v725, %v477
        %v727 = vsub.f32 %v723, %v726
        %s728 = sld [smem:[#allocation3 + $0x3f]]
        %v729 = vstv %s728
        %v730 = vmul.f32 %v729, %v478
        %v731 = vsub.f32 %v727, %v730
        %s732 = sld [smem:[#allocation3 + $0x25]]
        %v733 = vstv %s732
        %v734 = vmul.f32 %v733, %v429
        %v735 = vsub.f32 %v731, %v734
        %s736 = sld [smem:[#allocation3 + $0x2e]]
        %v737 = vstv %s736
        %v738 = vmul.f32 %v737, %v430
        %v739 = vsub.f32 %v735, %v738
        %s740 = sld [smem:[#allocation3 + $0x37]]
        %v741 = vstv %s740
        %v742 = vmul.f32 %v741, %v431
        %v743 = vsub.f32 %v739, %v742
        %s744 = sld [smem:[#allocation3 + $0x40]]
        %v745 = vstv %s744
        %v746 = vmul.f32 %v745, %v432
        %v747 = vsub.f32 %v743, %v746
        %s748 = sld [smem:[#allocation3 + $0x26]]
        %v749 = vstv %s748
        %v750 = vmul.f32 %v749, %v492
        %v751 = vsub.f32 %v747, %v750
        %s752 = sld [smem:[#allocation3 + $0x2f]]
        %v753 = vstv %s752
        %v754 = vmul.f32 %v753, %v493
        %v755 = vsub.f32 %v751, %v754
        %s756 = sld [smem:[#allocation3 + $0x38]]
        %v757 = vstv %s756
        %v758 = vmul.f32 %v757, %v494
        %v759 = vsub.f32 %v755, %v758
        %s760 = sld [smem:[#allocation3 + $0x41]]
        %v761 = vstv %s760
        %v762 = vmul.f32 %v761, %v495
        %v763 = vsub.f32 %v759, %v762
        %s764 = sld [smem:[#allocation3 + $0x27]]
        %v765 = vstv %s764
        %v766 = vmul.f32 %v765, %v508
        %v767 = vsub.f32 %v763, %v766
        %s768 = sld [smem:[#allocation3 + $0x30]]
        %v769 = vstv %s768
        %v770 = vmul.f32 %v769, %v509
        %v771 = vsub.f32 %v767, %v770
        %s772 = sld [smem:[#allocation3 + $0x39]]
        %v773 = vstv %s772
        %v774 = vmul.f32 %v773, %v510
        %v775 = vsub.f32 %v771, %v774
        %s776 = sld [smem:[#allocation3 + $0x42]]
        %v777 = vstv %s776
        %v778 = vmul.f32 %v777, %v511
        %v779 = vsub.f32 %v775, %v778
        %s780 = sld [smem:[#allocation3 + $0x28]]
        %v781 = vstv %s780
        %v782 = vmul.f32 %v781, %v388
        %v783 = vsub.f32 %v779, %v782
        %s784 = sld [smem:[#allocation3 + $0x31]]
        %v785 = vstv %s784
        %v786 = vmul.f32 %v785, %v389
        %v787 = vsub.f32 %v783, %v786
        %s788 = sld [smem:[#allocation3 + $0x3a]]
        %v789 = vstv %s788
        %v790 = vmul.f32 %v789, %v390
        %v791 = vsub.f32 %v787, %v790
        %s792 = sld [smem:[#allocation3 + $0x43]]
        %v793 = vstv %s792
        %v794 = vmul.f32 %v793, %v391
        %v795 = vsub.f32 %v791, %v794
        %s796 = sld [smem:[#allocation3 + $0x29]]
        %v797 = vstv %s796
        %v798 = vmul.f32 %v797, %v524
        %v799 = vsub.f32 %v795, %v798
        %s800 = sld [smem:[#allocation3 + $0x32]]
        %v801 = vstv %s800
        %v802 = vmul.f32 %v801, %v525
        %v803 = vsub.f32 %v799, %v802
        %s804 = sld [smem:[#allocation3 + $0x3b]]
        %v805 = vstv %s804
        %v806 = vmul.f32 %v805, %v526
        %v807 = vsub.f32 %v803, %v806
        %s808 = sld [smem:[#allocation3 + $0x44]]
        %v809 = vstv %s808
        %v810 = vmul.f32 %v809, %v527
        %v811 = vsub.f32 %v807, %v810
        %s812 = sld [smem:[#allocation3 + $0x2a]]
        %v813 = vstv %s812
        %v814 = vmul.f32 %v813, %v544
        %v815 = vsub.f32 %v811, %v814
        %s816 = sld [smem:[#allocation3 + $0x33]]
        %v817 = vstv %s816
        %v818 = vmul.f32 %v817, %v545
        %v819 = vsub.f32 %v815, %v818
        %s820 = sld [smem:[#allocation3 + $0x3c]]
        %v821 = vstv %s820
        %v822 = vmul.f32 %v821, %v546
        %v823 = vsub.f32 %v819, %v822
        %s824 = sld [smem:[#allocation3 + $0x45]]
        %v825 = vstv %s824
        %v826 = vmul.f32 %v825, %v547
        %v827 = vsub.f32 %v823, %v826
        %s828 = sld [smem:[#allocation3 + $0x2b]]
        %v829 = vstv %s828
        %v830 = vmul.f32 %v829, %v454
        %v831 = vsub.f32 %v827, %v830
        %s832 = sld [smem:[#allocation3 + $0x34]]
        %v833 = vstv %s832
        %v834 = vmul.f32 %v833, %v455
        %v835 = vsub.f32 %v831, %v834
        %s836 = sld [smem:[#allocation3 + $0x3d]]
        %v837 = vstv %s836
        %v838 = vmul.f32 %v837, %v456
        %v839 = vsub.f32 %v835, %v838
        %s840 = sld [smem:[#allocation3 + $0x46]]
        %v841 = vstv %s840
        %v842 = vmul.f32 %v841, %v457
        %v843 = vsub.f32 %v839, %v842
        %s844 = sld [smem:[#allocation3 + $0x2c]]
        %v845 = vstv %s844
        %v846 = vmul.f32 %v845, %v560
        %v847 = vsub.f32 %v843, %v846
        %s848 = sld [smem:[#allocation3 + $0x35]]
        %v849 = vstv %s848
        %v850 = vmul.f32 %v849, %v561
        %v851 = vsub.f32 %v847, %v850
        %s852 = sld [smem:[#allocation3 + $0x3e]]
        %v853 = vstv %s852
        %v854 = vmul.f32 %v853, %v562
        %v855 = vsub.f32 %v851, %v854
        %s856 = sld [smem:[#allocation3 + $0x47]]
        %v857 = vstv %s856
        %v858 = vmul.f32 %v857, %v563
        %v859 = vsub.f32 %v855, %v858
        %v860 = vmul.f32 %v389, %v859
        %v861 = vadd.f32 %v712, %v860
        %s862 = sld [smem:[#allocation7 + $0x2]]
        %v863 = vstv %s862
        %v864 = vsub.f32 %v390, %v863
        %s865 = sld [smem:[#allocation3 + $0x48]]
        %v866 = vstv %s865
        %v867 = vmul.f32 %v866, %v475
        %v868 = vsub.f32 %v864, %v867
        %s869 = sld [smem:[#allocation3 + $0x51]]
        %v870 = vstv %s869
        %v871 = vmul.f32 %v870, %v476
        %v872 = vsub.f32 %v868, %v871
        %s873 = sld [smem:[#allocation3 + $0x5a]]
        %v874 = vstv %s873
        %v875 = vmul.f32 %v874, %v477
        %v876 = vsub.f32 %v872, %v875
        %s877 = sld [smem:[#allocation3 + $0x63]]
        %v878 = vstv %s877
        %v879 = vmul.f32 %v878, %v478
        %v880 = vsub.f32 %v876, %v879
        %s881 = sld [smem:[#allocation3 + $0x49]]
        %v882 = vstv %s881
        %v883 = vmul.f32 %v882, %v429
        %v884 = vsub.f32 %v880, %v883
        %s885 = sld [smem:[#allocation3 + $0x52]]
        %v886 = vstv %s885
        %v887 = vmul.f32 %v886, %v430
        %v888 = vsub.f32 %v884, %v887
        %s889 = sld [smem:[#allocation3 + $0x5b]]
        %v890 = vstv %s889
        %v891 = vmul.f32 %v890, %v431
        %v892 = vsub.f32 %v888, %v891
        %s893 = sld [smem:[#allocation3 + $0x64]]
        %v894 = vstv %s893
        %v895 = vmul.f32 %v894, %v432
        %v896 = vsub.f32 %v892, %v895
        %s897 = sld [smem:[#allocation3 + $0x4a]]
        %v898 = vstv %s897
        %v899 = vmul.f32 %v898, %v492
        %v900 = vsub.f32 %v896, %v899
        %s901 = sld [smem:[#allocation3 + $0x53]]
        %v902 = vstv %s901
        %v903 = vmul.f32 %v902, %v493
        %v904 = vsub.f32 %v900, %v903
        %s905 = sld [smem:[#allocation3 + $0x5c]]
        %v906 = vstv %s905
        %v907 = vmul.f32 %v906, %v494
        %v908 = vsub.f32 %v904, %v907
        %s909 = sld [smem:[#allocation3 + $0x65]]
        %v910 = vstv %s909
        %v911 = vmul.f32 %v910, %v495
        %v912 = vsub.f32 %v908, %v911
        %s913 = sld [smem:[#allocation3 + $0x4b]]
        %v914 = vstv %s913
        %v915 = vmul.f32 %v914, %v508
        %v916 = vsub.f32 %v912, %v915
        %s917 = sld [smem:[#allocation3 + $0x54]]
        %v918 = vstv %s917
        %v919 = vmul.f32 %v918, %v509
        %v920 = vsub.f32 %v916, %v919
        %s921 = sld [smem:[#allocation3 + $0x5d]]
        %v922 = vstv %s921
        %v923 = vmul.f32 %v922, %v510
        %v924 = vsub.f32 %v920, %v923
        %s925 = sld [smem:[#allocation3 + $0x66]]
        %v926 = vstv %s925
        %v927 = vmul.f32 %v926, %v511
        %v928 = vsub.f32 %v924, %v927
        %s929 = sld [smem:[#allocation3 + $0x4c]]
        %v930 = vstv %s929
        %v931 = vmul.f32 %v930, %v388
        %v932 = vsub.f32 %v928, %v931
        %s933 = sld [smem:[#allocation3 + $0x55]]
        %v934 = vstv %s933
        %v935 = vmul.f32 %v934, %v389
        %v936 = vsub.f32 %v932, %v935
        %s937 = sld [smem:[#allocation3 + $0x5e]]
        %v938 = vstv %s937
        %v939 = vmul.f32 %v938, %v390
        %v940 = vsub.f32 %v936, %v939
        %s941 = sld [smem:[#allocation3 + $0x67]]
        %v942 = vstv %s941
        %v943 = vmul.f32 %v942, %v391
        %v944 = vsub.f32 %v940, %v943
        %s945 = sld [smem:[#allocation3 + $0x4d]]
        %v946 = vstv %s945
        %v947 = vmul.f32 %v946, %v524
        %v948 = vsub.f32 %v944, %v947
        %s949 = sld [smem:[#allocation3 + $0x56]]
        %v950 = vstv %s949
        %v951 = vmul.f32 %v950, %v525
        %v952 = vsub.f32 %v948, %v951
        %s953 = sld [smem:[#allocation3 + $0x5f]]
        %v954 = vstv %s953
        %v955 = vmul.f32 %v954, %v526
        %v956 = vsub.f32 %v952, %v955
        %s957 = sld [smem:[#allocation3 + $0x68]]
        %v958 = vstv %s957
        %v959 = vmul.f32 %v958, %v527
        %v960 = vsub.f32 %v956, %v959
        %s961 = sld [smem:[#allocation3 + $0x4e]]
        %v962 = vstv %s961
        %v963 = vmul.f32 %v962, %v544
        %v964 = vsub.f32 %v960, %v963
        %s965 = sld [smem:[#allocation3 + $0x57]]
        %v966 = vstv %s965
        %v967 = vmul.f32 %v966, %v545
        %v968 = vsub.f32 %v964, %v967
        %s969 = sld [smem:[#allocation3 + $0x60]]
        %v970 = vstv %s969
        %v971 = vmul.f32 %v970, %v546
        %v972 = vsub.f32 %v968, %v971
        %s973 = sld [smem:[#allocation3 + $0x69]]
        %v974 = vstv %s973
        %v975 = vmul.f32 %v974, %v547
        %v976 = vsub.f32 %v972, %v975
        %s977 = sld [smem:[#allocation3 + $0x4f]]
        %v978 = vstv %s977
        %v979 = vmul.f32 %v978, %v454
        %v980 = vsub.f32 %v976, %v979
        %s981 = sld [smem:[#allocation3 + $0x58]]
        %v982 = vstv %s981
        %v983 = vmul.f32 %v982, %v455
        %v984 = vsub.f32 %v980, %v983
        %s985 = sld [smem:[#allocation3 + $0x61]]
        %v986 = vstv %s985
        %v987 = vmul.f32 %v986, %v456
        %v988 = vsub.f32 %v984, %v987
        %s989 = sld [smem:[#allocation3 + $0x6a]]
        %v990 = vstv %s989
        %v991 = vmul.f32 %v990, %v457
        %v992 = vsub.f32 %v988, %v991
        %s993 = sld [smem:[#allocation3 + $0x50]]
        %v994 = vstv %s993
        %v995 = vmul.f32 %v994, %v560
        %v996 = vsub.f32 %v992, %v995
        %s997 = sld [smem:[#allocation3 + $0x59]]
        %v998 = vstv %s997
        %v999 = vmul.f32 %v998, %v561
        %v1000 = vsub.f32 %v996, %v999
        %s1001 = sld [smem:[#allocation3 + $0x62]]
        %v1002 = vstv %s1001
        %v1003 = vmul.f32 %v1002, %v562
        %v1004 = vsub.f32 %v1000, %v1003
        %s1005 = sld [smem:[#allocation3 + $0x6b]]
        %v1006 = vstv %s1005
        %v1007 = vmul.f32 %v1006, %v563
        %v1008 = vsub.f32 %v1004, %v1007
        %v1009 = vmul.f32 %v390, %v1008
        %v1010 = vadd.f32 %v861, %v1009
        %s1011 = sld [smem:[#allocation7 + $0x3]]
        %v1012 = vstv %s1011
        %v1013 = vsub.f32 %v391, %v1012
        %s1014 = sld [smem:[#allocation3 + $0x6c]]
        %v1015 = vstv %s1014
        %v1016 = vmul.f32 %v1015, %v475
        %v1017 = vsub.f32 %v1013, %v1016
        %s1018 = sld [smem:[#allocation3 + $0x75]]
        %v1019 = vstv %s1018
        %v1020 = vmul.f32 %v1019, %v476
        %v1021 = vsub.f32 %v1017, %v1020
        %s1022 = sld [smem:[#allocation3 + $0x7e]]
        %v1023 = vstv %s1022
        %v1024 = vmul.f32 %v1023, %v477
        %v1025 = vsub.f32 %v1021, %v1024
        %s1026 = sld [smem:[#allocation3 + $0x87]]
        %v1027 = vstv %s1026
        %v1028 = vmul.f32 %v1027, %v478
        %v1029 = vsub.f32 %v1025, %v1028
        %s1030 = sld [smem:[#allocation3 + $0x6d]]
        %v1031 = vstv %s1030
        %v1032 = vmul.f32 %v1031, %v429
        %v1033 = vsub.f32 %v1029, %v1032
        %s1034 = sld [smem:[#allocation3 + $0x76]]
        %v1035 = vstv %s1034
        %v1036 = vmul.f32 %v1035, %v430
        %v1037 = vsub.f32 %v1033, %v1036
        %s1038 = sld [smem:[#allocation3 + $0x7f]]
        %v1039 = vstv %s1038
        %v1040 = vmul.f32 %v1039, %v431
        %v1041 = vsub.f32 %v1037, %v1040
        %s1042 = sld [smem:[#allocation3 + $0x88]]
        %v1043 = vstv %s1042
        %v1044 = vmul.f32 %v1043, %v432
        %v1045 = vsub.f32 %v1041, %v1044
        %s1046 = sld [smem:[#allocation3 + $0x6e]]
        %v1047 = vstv %s1046
        %v1048 = vmul.f32 %v1047, %v492
        %v1049 = vsub.f32 %v1045, %v1048
        %s1050 = sld [smem:[#allocation3 + $0x77]]
        %v1051 = vstv %s1050
        %v1052 = vmul.f32 %v1051, %v493
        %v1053 = vsub.f32 %v1049, %v1052
        %s1054 = sld [smem:[#allocation3 + $0x80]]
        %v1055 = vstv %s1054
        %v1056 = vmul.f32 %v1055, %v494
        %v1057 = vsub.f32 %v1053, %v1056
        %s1058 = sld [smem:[#allocation3 + $0x89]]
        %v1059 = vstv %s1058
        %v1060 = vmul.f32 %v1059, %v495
        %v1061 = vsub.f32 %v1057, %v1060
        %s1062 = sld [smem:[#allocation3 + $0x6f]]
        %v1063 = vstv %s1062
        %v1064 = vmul.f32 %v1063, %v508
        %v1065 = vsub.f32 %v1061, %v1064
        %s1066 = sld [smem:[#allocation3 + $0x78]]
        %v1067 = vstv %s1066
        %v1068 = vmul.f32 %v1067, %v509
        %v1069 = vsub.f32 %v1065, %v1068
        %s1070 = sld [smem:[#allocation3 + $0x81]]
        %v1071 = vstv %s1070
        %v1072 = vmul.f32 %v1071, %v510
        %v1073 = vsub.f32 %v1069, %v1072
        %s1074 = sld [smem:[#allocation3 + $0x8a]]
        %v1075 = vstv %s1074
        %v1076 = vmul.f32 %v1075, %v511
        %v1077 = vsub.f32 %v1073, %v1076
        %s1078 = sld [smem:[#allocation3 + $0x70]]
        %v1079 = vstv %s1078
        %v1080 = vmul.f32 %v1079, %v388
        %v1081 = vsub.f32 %v1077, %v1080
        %s1082 = sld [smem:[#allocation3 + $0x79]]
        %v1083 = vstv %s1082
        %v1084 = vmul.f32 %v1083, %v389
        %v1085 = vsub.f32 %v1081, %v1084
        %s1086 = sld [smem:[#allocation3 + $0x82]]
        %v1087 = vstv %s1086
        %v1088 = vmul.f32 %v1087, %v390
        %v1089 = vsub.f32 %v1085, %v1088
        %s1090 = sld [smem:[#allocation3 + $0x8b]]
        %v1091 = vstv %s1090
        %v1092 = vmul.f32 %v1091, %v391
        %v1093 = vsub.f32 %v1089, %v1092
        %s1094 = sld [smem:[#allocation3 + $0x71]]
        %v1095 = vstv %s1094
        %v1096 = vmul.f32 %v1095, %v524
        %v1097 = vsub.f32 %v1093, %v1096
        %s1098 = sld [smem:[#allocation3 + $0x7a]]
        %v1099 = vstv %s1098
        %v1100 = vmul.f32 %v1099, %v525
        %v1101 = vsub.f32 %v1097, %v1100
        %s1102 = sld [smem:[#allocation3 + $0x83]]
        %v1103 = vstv %s1102
        %v1104 = vmul.f32 %v1103, %v526
        %v1105 = vsub.f32 %v1101, %v1104
        %s1106 = sld [smem:[#allocation3 + $0x8c]]
        %v1107 = vstv %s1106
        %v1108 = vmul.f32 %v1107, %v527
        %v1109 = vsub.f32 %v1105, %v1108
        %s1110 = sld [smem:[#allocation3 + $0x72]]
        %v1111 = vstv %s1110
        %v1112 = vmul.f32 %v1111, %v544
        %v1113 = vsub.f32 %v1109, %v1112
        %s1114 = sld [smem:[#allocation3 + $0x7b]]
        %v1115 = vstv %s1114
        %v1116 = vmul.f32 %v1115, %v545
        %v1117 = vsub.f32 %v1113, %v1116
        %s1118 = sld [smem:[#allocation3 + $0x84]]
        %v1119 = vstv %s1118
        %v1120 = vmul.f32 %v1119, %v546
        %v1121 = vsub.f32 %v1117, %v1120
        %s1122 = sld [smem:[#allocation3 + $0x8d]]
        %v1123 = vstv %s1122
        %v1124 = vmul.f32 %v1123, %v547
        %v1125 = vsub.f32 %v1121, %v1124
        %s1126 = sld [smem:[#allocation3 + $0x73]]
        %v1127 = vstv %s1126
        %v1128 = vmul.f32 %v1127, %v454
        %v1129 = vsub.f32 %v1125, %v1128
        %s1130 = sld [smem:[#allocation3 + $0x7c]]
        %v1131 = vstv %s1130
        %v1132 = vmul.f32 %v1131, %v455
        %v1133 = vsub.f32 %v1129, %v1132
        %s1134 = sld [smem:[#allocation3 + $0x85]]
        %v1135 = vstv %s1134
        %v1136 = vmul.f32 %v1135, %v456
        %v1137 = vsub.f32 %v1133, %v1136
        %s1138 = sld [smem:[#allocation3 + $0x8e]]
        %v1139 = vstv %s1138
        %v1140 = vmul.f32 %v1139, %v457
        %v1141 = vsub.f32 %v1137, %v1140
        %s1142 = sld [smem:[#allocation3 + $0x74]]
        %v1143 = vstv %s1142
        %v1144 = vmul.f32 %v1143, %v560
        %v1145 = vsub.f32 %v1141, %v1144
        %s1146 = sld [smem:[#allocation3 + $0x7d]]
        %v1147 = vstv %s1146
        %v1148 = vmul.f32 %v1147, %v561
        %v1149 = vsub.f32 %v1145, %v1148
        %s1150 = sld [smem:[#allocation3 + $0x86]]
        %v1151 = vstv %s1150
        %v1152 = vmul.f32 %v1151, %v562
        %v1153 = vsub.f32 %v1149, %v1152
        %s1154 = sld [smem:[#allocation3 + $0x8f]]
        %v1155 = vstv %s1154
        %v1156 = vmul.f32 %v1155, %v563
        %v1157 = vsub.f32 %v1153, %v1156
        %v1158 = vmul.f32 %v391, %v1157
        %v1159 = vadd.f32 %v1010, %v1158
        %p1160 = scmp.eq.s32.totalorder %s29, 0
        // Predicated region
        $region61: #{tpu_custom_call.1} parent=39 // pred_check
          %p1161 = pneg %p1160
        $region62: #{tpu_custom_call.1} parent=39 // pred_check_branch
          %1163 = sbr.rel (%p1161) target = $region64
        $region63: #{tpu_custom_call.1} parent=39 // pred_region
          %vm1164 = vcmask 130048
          %1165 = vst.msk [vmem:[#allocation2] sm:$0xff] %vm1164, %v1159
        $region64: #{tpu_custom_call.1} parent=39 // pred_fallthru
          _
        // Predicated region
        $region65: #{tpu_custom_call.1} parent=39 // pred_check
          %p1166 = pneg %p392
        $region66: #{tpu_custom_call.1} parent=39 // pred_check_branch
          %1168 = sbr.rel (%p1166) target = $region68
        $region67: #{tpu_custom_call.1} parent=39 // pred_region
          %v1169 = vld [vmem:[#allocation2] sm:$0xff]
          %v1170 = vadd.f32 %v1169, %v1159
          %vm1171 = vcmask 130048
          %1172 = vst.msk [vmem:[#allocation2] sm:$0xff] %vm1171, %v1170
        $region68: #{tpu_custom_call.1} parent=39 // pred_fallthru
          _
        %p1173 = scmp.eq.s32.totalorder %s29, 1
        // Predicated region
        $region69: #{tpu_custom_call.1} parent=39 // pred_check
          %p1174 = pneg %p1173
        $region70: #{tpu_custom_call.1} parent=39 // pred_check_branch
          %1176 = sbr.rel (%p1174) target = $region72
        $region71: #{tpu_custom_call.1} parent=39 // pred_region
          %v1177 = vld [vmem:[#allocation2] sm:$0xff]
          %vm1178 = vcmask 130048
          %v1179 = vsel %vm1178, %v1177, 0.0
          %1180 = vadd.xlane.f32.xlu0 %v1179
          %v1181 = vpop.xlane.xlu0 %1180
          %v1182 = vrot.slane %v1181, 4
          %v1183 = vadd.f32 %v1181, %v1182
          %v1184 = vrot.slane %v1183, 2
          %v1185 = vadd.f32 %v1183, %v1184
          %v1186 = vrot.slane %v1185, 1
          %v1187 = vadd.f32 %v1185, %v1186
          %s1188 = vtos %v1187
          %v1189 = vstv %s1188
          %vm1190 = vcmask 0
          %1191 = vst.msk [vmem:[%s387] sm:$0x1] %vm1190, %v1189
        $region72: #{tpu_custom_call.1} parent=39 // pred_fallthru
          _
        %p1192 = scmp.lt.s32.totalorder %s28, 1
        %s1193 = scalar_select %p1192, %s28, 1
        %s1194 = scalar_lea.vmem %s5, %s1193
        // Predicated region
        $region73: #{tpu_custom_call.1} parent=39 // pred_check
          %p1195 = pneg %p192
        $region74: #{tpu_custom_call.1} parent=39 // pred_check_branch
          %1197 = sbr.rel (%p1195) target = $region76
        $region75: #{tpu_custom_call.1} parent=39 // pred_region
          _
        $region76: #{tpu_custom_call.1} parent=39 // pred_fallthru
          _
      $region40: #{tpu_custom_call.1} parent=5 // pred_fallthru
        _
      %p1198 = scmp.le.s32.totalorder 2, %s19
      // Predicated region
      $region77: #{tpu_custom_call.1} parent=5 // pred_check
        %p1199 = pneg %p1198
      $region78: #{tpu_custom_call.1} parent=5 // pred_check_branch
        %1201 = sbr.rel (%p1199) target = $region80
      $region79: #{tpu_custom_call.1} parent=5 // pred_region
        %s1202 = ssub.s32 %s19, 2
        // Predicated region
        $region81: #{tpu_custom_call.1} parent=79 // pred_check
          %p1203 = pneg %p198
        $region82: #{tpu_custom_call.1} parent=79 // pred_check_branch
          %1205 = sbr.rel (%p1203) target = $region84
        $region83: #{tpu_custom_call.1} parent=79 // pred_region
          %p1206 = scmp.lt.s32.totalorder %s30, 1
          %s1207 = scalar_select %p1206, %s30, 1
          %s1208 = scalar_lea.vmem %s5, %s1207
        $region84: #{tpu_custom_call.1} parent=79 // pred_fallthru
          _
      $region80: #{tpu_custom_call.1} parent=5 // pred_fallthru
        _
    $region6: #{tpu_custom_call.1} parent=1 // loop_footer
      %s23 = sadd.s32 1, %s19
    $region7: #{tpu_custom_call.1} parent=1 // loop_footer_branch
      %18 = sbr.rel target = $region3
    $region8: #{tpu_custom_call.1} parent=1 // loop_exit
      _
    %1209 = vsyncpa [#allocation4], 1
    %s1210 = scalar_lea.sflag [#allocation4], 1
    %1211 = vsyncpa %s1210, 1
    %1212 = vsyncpa [#allocation10], 1
    %s1213 = scalar_lea.sflag [#allocation10], 1
    %1214 = vsyncpa %s1213, 1
    %1215 = vsyncpa [#allocation5], 1
    %s1216 = scalar_lea.sflag [#allocation5], 1
    %1217 = vsyncpa %s1216, 1
    %1218 = vsyncpa [#allocation6], 1
    %s1219 = scalar_lea.sflag [#allocation6], 1
    %1220 = vsyncpa %s1219, 1

</llo_original>
